<compile_context>
chip_gen: v7x
topology: tpu7x:2x2x1
jax: 0.10.0
libtpu: 0.0.40
codegen_flags: <defaults>
</compile_context>

<pallas_src>
from functools import partial

import jax
import jax.numpy as jnp
from jax.experimental import pallas as pl
from jax.experimental.pallas import tpu as pltpu

LANE = 128
FUSED_MAX_PADDED_NODES = 1024   # whole padded A fits comfortably in VMEM up to here


def _round_up(n, m):
    return ((n + m - 1) // m) * m


def _pad2(a, rows, cols):
    r, c = a.shape
    return jnp.pad(a, ((0, rows - r), (0, cols - c)))


def _vmem_limit(need_bytes):
    """Generation-aware VMEM limit: derived budget, clamped to 3/4 of capacity."""
    try:
        cap = int(pltpu.get_tpu_info().vmem_capacity_bytes)   # 128 MiB v5e/v6e, 64 MiB v7x
    except Exception:                                         # conservative fallback
        cap = 64 << 20
    budget = max(2 * int(need_bytes), 16 << 20)
    return int(min(budget, cap * 3 // 4))


# --------------------------------------------------------------------------- #
# Kernels
# --------------------------------------------------------------------------- #
def gcn_fused_kernel(a_ref, x_ref, w1_ref, b1_ref, w2_ref, b2_ref,
                     w3_ref, b3_ref, o_ref):
    """Whole network in one step: A resident in VMEM (small padded N)."""
    bf = jnp.bfloat16
    a = a_ref[...]
    p1 = jnp.dot(x_ref[...], w1_ref[...],
                 preferred_element_type=jnp.float32).astype(bf)
    h1 = jnp.maximum(jnp.dot(a, p1, preferred_element_type=jnp.float32)
                     + b1_ref[...], 0.0).astype(bf)
    p2 = jnp.dot(h1, w2_ref[...], preferred_element_type=jnp.float32).astype(bf)
    h2 = jnp.maximum(jnp.dot(a, p2, preferred_element_type=jnp.float32)
                     + b2_ref[...], 0.0).astype(bf)
    out = jnp.dot(h2, w3_ref[...], preferred_element_type=jnp.float32) + b3_ref[...]
    o_ref[...] = out.astype(o_ref.dtype)


def gcn_conv_proj_kernel(a_ref, p_ref, b_ref, w_ref, o_ref, acc_ref):
    """conv1 fused with the W2 projection: O = relu(A @ P1 + b1) @ W2.

    A streams as (tm, tk) tiles, P1 streams as (tk, h) tiles; f32 accumulator.
    """
    k = pl.program_id(1)

    @pl.when(k == 0)
    def _init():
        acc_ref[...] = jnp.zeros_like(acc_ref)

    acc_ref[...] += jnp.dot(a_ref[...], p_ref[...],
                            preferred_element_type=jnp.float32)

    @pl.when(k == pl.num_programs(1) - 1)
    def _finalize():
        h1 = jnp.maximum(acc_ref[...] + b_ref[...], 0.0).astype(w_ref.dtype)
        o_ref[...] = jnp.dot(h1, w_ref[...],
                             preferred_element_type=jnp.float32).astype(o_ref.dtype)


def gcn_conv_head_kernel(a_ref, p_ref, b_ref, w3_ref, b3_ref, o_ref, acc_ref):
    """conv2 fused with the Linear head: O = relu(A @ P2 + b2) @ W3 + b3."""
    k = pl.program_id(1)

    @pl.when(k == 0)
    def _init():
        acc_ref[...] = jnp.zeros_like(acc_ref)

    acc_ref[...] += jnp.dot(a_ref[...], p_ref[...],
                            preferred_element_type=jnp.float32)

    @pl.when(k == pl.num_programs(1) - 1)
    def _finalize():
        h2 = jnp.maximum(acc_ref[...] + b_ref[...], 0.0).astype(w3_ref.dtype)
        out = jnp.dot(h2, w3_ref[...],
                      preferred_element_type=jnp.float32) + b3_ref[...]
        o_ref[...] = out.astype(o_ref.dtype)


# --------------------------------------------------------------------------- #
# pallas_call wrappers
# --------------------------------------------------------------------------- #
def _fused_call(a_pad, x_p, w1, b1, w2, b2, w3, b3):
    n_pad = a_pad.shape[0]
    hp, op, ep = w1.shape[1], w2.shape[1], w3.shape[1]
    need = (n_pad * n_pad * 2 + n_pad * x_p.shape[1] * 2
            + 6 * n_pad * max(hp, op, ep) * 4
            + (w1.size + w2.size + w3.size) * 2)
    return pl.pallas_call(
        gcn_fused_kernel,
        out_shape=jax.ShapeDtypeStruct((n_pad, ep), jnp.bfloat16),
        compiler_params=pltpu.CompilerParams(vmem_limit_bytes=_vmem_limit(need)),
    )(a_pad, x_p, w1, b1, w2, b2, w3, b3)


def _conv_proj_call(a_pad, p, b, w_next, *, tm, tk):
    n_pad = a_pad.shape[0]
    h = p.shape[1]
    e = w_next.shape[1]
    grid = (n_pad // tm, n_pad // tk)
    need = (2 * tm * tk * 2          # A, double-buffered bf16
            + 2 * tk * h * 2         # P stream, double-buffered bf16
            + tm * h * 4             # f32 accumulator
            + 2 * tm * e * 2         # output, double-buffered bf16
            + 2 * (h * 4 + h * e * 2))   # constants (bias, W_next)
    return pl.pallas_call(
        gcn_conv_proj_kernel,
        out_shape=jax.ShapeDtypeStruct((n_pad, e), jnp.bfloat16),
        grid_spec=pltpu.PrefetchScalarGridSpec(
            num_scalar_prefetch=0,
            grid=grid,
            in_specs=[
                pl.BlockSpec((tm, tk), lambda i, k: (i, k)),   # A streams
                pl.BlockSpec((tk, h), lambda i, k: (k, 0)),    # P streams
                pl.BlockSpec((1, h), lambda i, k: (0, 0)),     # bias (constant)
                pl.BlockSpec((h, e), lambda i, k: (0, 0)),     # W_next (constant)
            ],
            out_specs=pl.BlockSpec((tm, e), lambda i, k: (i, 0)),
            scratch_shapes=[pltpu.VMEM((tm, h), jnp.float32)],
        ),
        compiler_params=pltpu.CompilerParams(
            dimension_semantics=("parallel", "arbitrary"),
            vmem_limit_bytes=_vmem_limit(need),
        ),
        cost_estimate=pl.CostEstimate(
            flops=2 * n_pad * n_pad * h + 2 * n_pad * h * e,
            transcendentals=0,
            bytes_accessed=n_pad * n_pad * 2 + n_pad * h * 2 + h * e * 2
            + n_pad * e * 2,
        ),
    )(a_pad, p, b, w_next)


def _conv_head_call(a_pad, p, b, w3, b3, *, tm, tk):
    n_pad = a_pad.shape[0]
    h = p.shape[1]
    e = w3.shape[1]
    grid = (n_pad // tm, n_pad // tk)
    need = (2 * tm * tk * 2 + 2 * tk * h * 2 + tm * h * 4 + 2 * tm * e * 2
            + 2 * (h * 4 + h * e * 2 + e * 4))
    return pl.pallas_call(
        gcn_conv_head_kernel,
        out_shape=jax.ShapeDtypeStruct((n_pad, e), jnp.bfloat16),
        grid_spec=pltpu.PrefetchScalarGridSpec(
            num_scalar_prefetch=0,
            grid=grid,
            in_specs=[
                pl.BlockSpec((tm, tk), lambda i, k: (i, k)),   # A streams
                pl.BlockSpec((tk, h), lambda i, k: (k, 0)),    # P streams
                pl.BlockSpec((1, h), lambda i, k: (0, 0)),     # bias (constant)
                pl.BlockSpec((h, e), lambda i, k: (0, 0)),     # head W (constant)
                pl.BlockSpec((1, e), lambda i, k: (0, 0)),     # head b (constant)
            ],
            out_specs=pl.BlockSpec((tm, e), lambda i, k: (i, 0)),
            scratch_shapes=[pltpu.VMEM((tm, h), jnp.float32)],
        ),
        compiler_params=pltpu.CompilerParams(
            dimension_semantics=("parallel", "arbitrary"),
            vmem_limit_bytes=_vmem_limit(need),
        ),
        cost_estimate=pl.CostEstimate(
            flops=2 * n_pad * n_pad * h + 2 * n_pad * h * e,
            transcendentals=0,
            bytes_accessed=n_pad * n_pad * 2 + n_pad * h * 2 + h * e * 2
            + n_pad * e * 2,
        ),
    )(a_pad, p, b, w3, b3)


# --------------------------------------------------------------------------- #
# Planning / preprocessing (hoisted out of the per-forward path)
# --------------------------------------------------------------------------- #
def plan_tiles(num_nodes, *, max_tile=512, fused_max_nodes=FUSED_MAX_PADDED_NODES):
    """Pick (tile, n_pad, fused). Keeps >=2 row blocks on the tiled path (v7x)."""
    n128 = _round_up(num_nodes, LANE)
    if n128 <= fused_max_nodes:
        return n128, n128, True
    tile = max_tile
    while tile > LANE and pl.cdiv(num_nodes, tile) < 2:
        tile //= 2
    return tile, _round_up(num_nodes, tile), False


def build_norm_adjacency(edge_index, num_nodes):
    """Dense D^{-1/2}(A + I)D^{-1/2}: scatter-add edges, add missing self loops.

    Matches PyG add_remaining_self_loops semantics for simple unweighted graphs.
    """
    src, dst = edge_index[0], edge_index[1]
    adj = jnp.zeros((num_nodes, num_nodes), jnp.float32)
    adj = adj.at[dst, src].add(1.0)                  # messages flow src -> dst
    diag = jnp.diagonal(adj)
    adj = adj + jnp.diag(jnp.where(diag == 0.0, 1.0, 0.0))
    deg = jnp.sum(adj, axis=1)
    d_inv_sqrt = jnp.where(deg > 0, 1.0 / jnp.sqrt(deg), 0.0)
    return d_inv_sqrt[:, None] * adj * d_inv_sqrt[None, :]


def pad_adjacency(a_norm, n_pad):
    """Pad + cast A once, outside the per-forward path (saves an N^2 pass)."""
    return _pad2(a_norm, n_pad, n_pad).astype(jnp.bfloat16)


# --------------------------------------------------------------------------- #
# Model forward (matches GCNNetwork: conv1 -> relu -> conv2 -> relu -> lin)
# --------------------------------------------------------------------------- #
@partial(jax.jit, static_argnames=("tile", "fused"))
def gcn_network_forward(x, a_pad, params, *, tile, fused):
    w1, b1, w2, b2, w3, b3 = params
    n = x.shape[0]
    n_pad = a_pad.shape[0]
    cin_p = _round_up(x.shape[1], LANE)
    hp = _round_up(w1.shape[1], LANE)   # padded hidden channels
    op = _round_up(w2.shape[1], LANE)   # padded out channels
    ep = _round_up(w3.shape[1], LANE)   # padded head width (2 -> 128)

    bf = jnp.bfloat16
    x_p = _pad2(x, n_pad, cin_p).astype(bf)
    w1_p = _pad2(w1, cin_p, hp).astype(bf)
    b1_p = _pad2(b1, 1, hp).astype(jnp.float32)
    w2_p = _pad2(w2, hp, op).astype(bf)
    b2_p = _pad2(b2, 1, op).astype(jnp.float32)
    w3_p = _pad2(w3, op, ep).astype(bf)
    b3_p = _pad2(b3, 1, ep).astype(jnp.float32)

    if fused:
        logits_pad = _fused_call(a_pad, x_p, w1_p, b1_p, w2_p, b2_p, w3_p, b3_p)
    else:
        # Tiny X @ W1 projection (n_pad x cin x 128) stays as an XLA matmul.
        p1 = jnp.dot(x_p, w1_p, preferred_element_type=jnp.float32).astype(bf)
        # conv1 + W2 projection fused -> P2 directly (no h1/p2 HBM round trip).
        p2 = _conv_proj_call(a_pad, p1, b1_p, w2_p, tm=tile, tk=tile)
        # conv2 + Linear head fused.
        logits_pad = _conv_head_call(a_pad, p2, b2_p, w3_p, b3_p, tm=tile, tk=tile)

    return logits_pad[:n, : w3.shape[1]].astype(jnp.float32)


# --------------------------------------------------------------------------- #
# Params & references
# --------------------------------------------------------------------------- #
def init_params(key, in_channels, hidden_channels, out_channels):
    k1, k2, k3, k4, k5, k6 = jax.random.split(key, 6)
    w1 = jax.random.normal(k1, (in_channels, hidden_channels), jnp.float32) * 0.2
    b1 = jax.random.normal(k4, (1, hidden_channels), jnp.float32) * 0.1
    w2 = jax.random.normal(k2, (hidden_channels, out_channels), jnp.float32) * 0.2
    b2 = jax.random.normal(k5, (1, out_channels), jnp.float32) * 0.1
    w3 = jax.random.normal(k3, (out_channels, 2), jnp.float32) * 0.2
    b3 = jax.random.normal(k6, (1, 2), jnp.float32) * 0.1
    return (w1, b1, w2, b2, w3, b3)


def reference_forward_f32(x, a_norm, params):
    w1, b1, w2, b2, w3, b3 = params
    h1 = jnp.maximum(a_norm @ (x @ w1) + b1, 0.0)
    h2 = jnp.maximum(a_norm @ (h1 @ w2) + b2, 0.0)
    return h2 @ w3 + b3


def reference_forward_bf16(x, a_norm, params):
    """Mirrors kernel numerics: bf16 MXU inputs, f32 accumulation."""
    w1, b1, w2, b2, w3, b3 = params
    bf = jnp.bfloat16
    a = a_norm.astype(bf)
    p1 = jnp.dot(x.astype(bf), w1.astype(bf),
                 preferred_element_type=jnp.float32).astype(bf)
    h1 = jnp.maximum(jnp.dot(a, p1, preferred_element_type=jnp.float32) + b1,
                     0.0).astype(bf)
    p2 = jnp.dot(h1, w2.astype(bf), preferred_element_type=jnp.float32).astype(bf)
    h2 = jnp.maximum(jnp.dot(a, p2, preferred_element_type=jnp.float32) + b2, 0.0)
    return jnp.dot(h2.astype(bf), w3.astype(bf),
                   preferred_element_type=jnp.float32) + b3


if __name__ == "__main__":
    num_nodes = 200
    in_channels, hidden_channels, out_channels = 4, 32, 16

    key = jax.random.PRNGKey(0)
    kx, kp = jax.random.split(key)
    x = jax.random.normal(kx, (num_nodes, in_channels), jnp.float32)

    # Symmetric ring graph: edges (i, i+1) in both directions.
    src = jnp.arange(num_nodes, dtype=jnp.int32)
    dst = (src + 1) % num_nodes
    edge_index = jnp.stack(
        [jnp.concatenate([src, dst]), jnp.concatenate([dst, src])], axis=0
    )  # [2, 2N]

    a_norm = build_norm_adjacency(edge_index, num_nodes)
    params = init_params(kp, in_channels, hidden_channels, out_channels)

    ref_bf16 = reference_forward_bf16(x, a_norm, params)
    ref_f32 = reference_forward_f32(x, a_norm, params)

    # --- Path 1: fused single-kernel (the natural choice at this size) ------ #
    tile, n_pad, fused = plan_tiles(num_nodes)          # N=200 -> fused, n_pad=256
    a_pad = jax.block_until_ready(pad_adjacency(a_norm, n_pad))  # hoisted, once
    out = gcn_network_forward(x, a_pad, params, tile=tile, fused=fused)
    out = jax.block_until_ready(out)

    assert out.shape == (num_nodes, 2)
    assert bool(jnp.allclose(out, ref_bf16, atol=2e-2, rtol=2e-2)), "fused vs bf16 ref"
    assert bool(jnp.allclose(out, ref_f32, atol=5e-2, rtol=5e-2)), "fused vs f32 ref"

    # --- Path 2: tiled/streaming path (what large graphs use) -------------- #
    tile_t = 128                      # 2x2 grid at n_pad=256 exercises both axes
    assert n_pad % tile_t == 0
    out_t = gcn_network_forward(x, a_pad, params, tile=tile_t, fused=False)
    out_t = jax.block_until_ready(out_t)

    assert out_t.shape == (num_nodes, 2)
    assert bool(jnp.allclose(out_t, ref_bf16, atol=2e-2, rtol=2e-2)), "tiled vs bf16 ref"
    assert bool(jnp.allclose(out_t, ref_f32, atol=5e-2, rtol=5e-2)), "tiled vs f32 ref"

    print("KERNEL_OK")
</pallas_src>

<mosaic_0001>
module attributes {stable_mosaic.version = 11 : i64} {
  func.func @gcn_fused_kernel(%arg0: memref<256x256xbf16, #tpu.memory_space<vmem>>, %arg1: memref<256x128xbf16, #tpu.memory_space<vmem>>, %arg2: memref<128x128xbf16, #tpu.memory_space<vmem>>, %arg3: memref<1x128xf32, #tpu.memory_space<vmem>>, %arg4: memref<128x128xbf16, #tpu.memory_space<vmem>>, %arg5: memref<1x128xf32, #tpu.memory_space<vmem>>, %arg6: memref<128x128xbf16, #tpu.memory_space<vmem>>, %arg7: memref<1x128xf32, #tpu.memory_space<vmem>>, %arg8: memref<256x128xbf16, #tpu.memory_space<vmem>>) attributes {dimension_semantics = [], scalar_prefetch = 0 : i64, scratch_operands = 0 : i64, tpu.core_type = #tpu.core_type<tc>} {
    %c0 = arith.constant 0 : index
    %c0_0 = arith.constant 0 : index
    %0 = vector.load %arg0[%c0, %c0_0] : memref<256x256xbf16, #tpu.memory_space<vmem>>, vector<256x256xbf16>
    %c0_1 = arith.constant 0 : index
    %c0_2 = arith.constant 0 : index
    %1 = vector.load %arg1[%c0_1, %c0_2] : memref<256x128xbf16, #tpu.memory_space<vmem>>, vector<256x128xbf16>
    %c0_3 = arith.constant 0 : index
    %c0_4 = arith.constant 0 : index
    %2 = vector.load %arg2[%c0_3, %c0_4] : memref<128x128xbf16, #tpu.memory_space<vmem>>, vector<128x128xbf16>
    %cst = arith.constant dense<0.000000e+00> : vector<256x128xf32>
    %3 = tpu.matmul %1, %2, %cst {dimension_numbers = #tpu.dot_dimension_numbers<[1], [0], [0], [1], [0, 0, 1, 1], [], []>} : vector<256x128xbf16>, vector<128x128xbf16>, vector<256x128xf32> -> vector<256x128xf32>
    %4 = arith.truncf %3 : vector<256x128xf32> to vector<256x128xbf16>
    %cst_5 = arith.constant dense<0.000000e+00> : vector<256x128xf32>
    %5 = tpu.matmul %0, %4, %cst_5 {dimension_numbers = #tpu.dot_dimension_numbers<[1], [0], [0], [1], [0, 0, 1, 1], [], []>} : vector<256x256xbf16>, vector<256x128xbf16>, vector<256x128xf32> -> vector<256x128xf32>
    %c0_6 = arith.constant 0 : index
    %c0_7 = arith.constant 0 : index
    %6 = vector.load %arg3[%c0_6, %c0_7] : memref<1x128xf32, #tpu.memory_space<vmem>>, vector<1x128xf32>
    %7 = vector.broadcast %6 : vector<1x128xf32> to vector<256x128xf32>
    %8 = arith.addf %5, %7 : vector<256x128xf32>
    %cst_8 = arith.constant 0.000000e+00 : f32
    %9 = vector.broadcast %cst_8 : f32 to vector<256x128xf32>
    %10 = arith.maximumf %8, %9 : vector<256x128xf32>
    %11 = arith.truncf %10 : vector<256x128xf32> to vector<256x128xbf16>
    %c0_9 = arith.constant 0 : index
    %c0_10 = arith.constant 0 : index
    %12 = vector.load %arg4[%c0_9, %c0_10] : memref<128x128xbf16, #tpu.memory_space<vmem>>, vector<128x128xbf16>
    %cst_11 = arith.constant dense<0.000000e+00> : vector<256x128xf32>
    %13 = tpu.matmul %11, %12, %cst_11 {dimension_numbers = #tpu.dot_dimension_numbers<[1], [0], [0], [1], [0, 0, 1, 1], [], []>} : vector<256x128xbf16>, vector<128x128xbf16>, vector<256x128xf32> -> vector<256x128xf32>
    %14 = arith.truncf %13 : vector<256x128xf32> to vector<256x128xbf16>
    %cst_12 = arith.constant dense<0.000000e+00> : vector<256x128xf32>
    %15 = tpu.matmul %0, %14, %cst_12 {dimension_numbers = #tpu.dot_dimension_numbers<[1], [0], [0], [1], [0, 0, 1, 1], [], []>} : vector<256x256xbf16>, vector<256x128xbf16>, vector<256x128xf32> -> vector<256x128xf32>
    %c0_13 = arith.constant 0 : index
    %c0_14 = arith.constant 0 : index
    %16 = vector.load %arg5[%c0_13, %c0_14] : memref<1x128xf32, #tpu.memory_space<vmem>>, vector<1x128xf32>
    %17 = vector.broadcast %16 : vector<1x128xf32> to vector<256x128xf32>
    %18 = arith.addf %15, %17 : vector<256x128xf32>
    %cst_15 = arith.constant 0.000000e+00 : f32
    %19 = vector.broadcast %cst_15 : f32 to vector<256x128xf32>
    %20 = arith.maximumf %18, %19 : vector<256x128xf32>
    %21 = arith.truncf %20 : vector<256x128xf32> to vector<256x128xbf16>
    %c0_16 = arith.constant 0 : index
    %c0_17 = arith.constant 0 : index
    %22 = vector.load %arg6[%c0_16, %c0_17] : memref<128x128xbf16, #tpu.memory_space<vmem>>, vector<128x128xbf16>
    %cst_18 = arith.constant dense<0.000000e+00> : vector<256x128xf32>
    %23 = tpu.matmul %21, %22, %cst_18 {dimension_numbers = #tpu.dot_dimension_numbers<[1], [0], [0], [1], [0, 0, 1, 1], [], []>} : vector<256x128xbf16>, vector<128x128xbf16>, vector<256x128xf32> -> vector<256x128xf32>
    %c0_19 = arith.constant 0 : index
    %c0_20 = arith.constant 0 : index
    %24 = vector.load %arg7[%c0_19, %c0_20] : memref<1x128xf32, #tpu.memory_space<vmem>>, vector<1x128xf32>
    %25 = vector.broadcast %24 : vector<1x128xf32> to vector<256x128xf32>
    %26 = arith.addf %23, %25 : vector<256x128xf32>
    %27 = arith.truncf %26 : vector<256x128xf32> to vector<256x128xbf16>
    %c0_21 = arith.constant 0 : index
    %c0_22 = arith.constant 0 : index
    %28 = vector.load %arg8[%c0_21, %c0_22] : memref<256x128xbf16, #tpu.memory_space<vmem>>, vector<256x128xbf16>
    tpu.vector_store %arg8[%c0_21, %c0_22], %27 {strides = array<i32>} : memref<256x128xbf16, #tpu.memory_space<vmem>>, vector<256x128xbf16>,
    return
  }
}

</mosaic_0001>

<llo_original>
// kernel: gcn_network_forward.1
$region0: #{gcn_network_forward.1}
  #allocation0 [shape = 'u32[]', space=smem, size = 0x4, offset = 0x4, fixed_abs, tag = 'smem constant byte address 0x4 - core index']
  #allocation1 [shape = 'u32[144,128]{1,0:T(1,128)}', space=vmem, size = 0x12000, scoped, tag = 'internal scratch']
  %s0 = inlined_call_operand.vmem [shape: bf16[256,256], index: 0, kind: input, shape index: {}]
  %s1 = inlined_call_operand.vmem [shape: bf16[256,128], index: 1, kind: input, shape index: {}]
  %s2 = inlined_call_operand.vmem [shape: bf16[128,128], index: 2, kind: input, shape index: {}]
  %s3 = inlined_call_operand.vmem [shape: f32[1,128], index: 3, kind: input, shape index: {}]
  %s4 = inlined_call_operand.vmem [shape: bf16[128,128], index: 4, kind: input, shape index: {}]
  %s5 = inlined_call_operand.vmem [shape: f32[1,128], index: 5, kind: input, shape index: {}]
  %s6 = inlined_call_operand.vmem [shape: bf16[128,128], index: 6, kind: input, shape index: {}]
  %s7 = inlined_call_operand.vmem [shape: f32[1,128], index: 7, kind: input, shape index: {}]
  %s8 = inlined_call_operand.vmem [shape: bf16[256,128], index: 8, kind: output, shape index: {}]
  %s9 = sld [smem:[#allocation0]]
  $region42: #{gcn_network_forward.1} parent=0
    _
  %s11 = ssub.s32 1, %s9
  %s12 = scalar_select 0, %s11, %s9
  // Predicated region
  $region2: #{gcn_network_forward.1} parent=0 // pred_check
    _
  $region3: #{gcn_network_forward.1} parent=0 // pred_check_branch
    %14 = sbr.rel (0) target = $region5
  $region4: #{gcn_network_forward.1} parent=0 // pred_region
    _
  $region5: #{gcn_network_forward.1} parent=0 // pred_fallthru
    _
  // Predicated region
  $region6: #{gcn_network_forward.1} parent=0 // pred_check
    _
  $region7: #{gcn_network_forward.1} parent=0 // pred_check_branch
    %16 = sbr.rel (0) target = $region9
  $region8: #{gcn_network_forward.1} parent=0 // pred_region
    _
  $region9: #{gcn_network_forward.1} parent=0 // pred_fallthru
    _
  // Predicated region
  $region10: #{gcn_network_forward.1} parent=0 // pred_check
    _
  $region11: #{gcn_network_forward.1} parent=0 // pred_check_branch
    %18 = sbr.rel (0) target = $region13
  $region12: #{gcn_network_forward.1} parent=0 // pred_region
    _
  $region13: #{gcn_network_forward.1} parent=0 // pred_fallthru
    _
  // Predicated region
  $region14: #{gcn_network_forward.1} parent=0 // pred_check
    _
  $region15: #{gcn_network_forward.1} parent=0 // pred_check_branch
    %20 = sbr.rel (0) target = $region17
  $region16: #{gcn_network_forward.1} parent=0 // pred_region
    _
  $region17: #{gcn_network_forward.1} parent=0 // pred_fallthru
    _
  // Predicated region
  $region18: #{gcn_network_forward.1} parent=0 // pred_check
    _
  $region19: #{gcn_network_forward.1} parent=0 // pred_check_branch
    %22 = sbr.rel (0) target = $region21
  $region20: #{gcn_network_forward.1} parent=0 // pred_region
    _
  $region21: #{gcn_network_forward.1} parent=0 // pred_fallthru
    _
  // Predicated region
  $region22: #{gcn_network_forward.1} parent=0 // pred_check
    _
  $region23: #{gcn_network_forward.1} parent=0 // pred_check_branch
    %24 = sbr.rel (0) target = $region25
  $region24: #{gcn_network_forward.1} parent=0 // pred_region
    _
  $region25: #{gcn_network_forward.1} parent=0 // pred_fallthru
    _
  // Predicated region
  $region26: #{gcn_network_forward.1} parent=0 // pred_check
    _
  $region27: #{gcn_network_forward.1} parent=0 // pred_check_branch
    %26 = sbr.rel (0) target = $region29
  $region28: #{gcn_network_forward.1} parent=0 // pred_region
    _
  $region29: #{gcn_network_forward.1} parent=0 // pred_fallthru
    _
  // Predicated region
  $region30: #{gcn_network_forward.1} parent=0 // pred_check
    _
  $region31: #{gcn_network_forward.1} parent=0 // pred_check_branch
    %28 = sbr.rel (0) target = $region33
  $region32: #{gcn_network_forward.1} parent=0 // pred_region
    _
  $region33: #{gcn_network_forward.1} parent=0 // pred_fallthru
    _
  %v30 = vld [vmem:[%s0] sm:$0xff]
  %v31 = vld [vmem:[%s0 + $0x8] sm:$0xff]
  %v32 = vld [vmem:[%s0 + $0x10] sm:$0xff]
  %v33 = vld [vmem:[%s0 + $0x18] sm:$0xff]
  %v34 = vld [vmem:[%s0 + $0x20] sm:$0xff]
  %v35 = vld [vmem:[%s0 + $0x28] sm:$0xff]
  %v36 = vld [vmem:[%s0 + $0x30] sm:$0xff]
  %v37 = vld [vmem:[%s0 + $0x38] sm:$0xff]
  %v38 = vld [vmem:[%s0 + $0x40] sm:$0xff]
  %v39 = vld [vmem:[%s0 + $0x48] sm:$0xff]
  %v40 = vld [vmem:[%s0 + $0x50] sm:$0xff]
  %v41 = vld [vmem:[%s0 + $0x58] sm:$0xff]
  %v42 = vld [vmem:[%s0 + $0x60] sm:$0xff]
  %v43 = vld [vmem:[%s0 + $0x68] sm:$0xff]
  %v44 = vld [vmem:[%s0 + $0x70] sm:$0xff]
  %v45 = vld [vmem:[%s0 + $0x78] sm:$0xff]
  %v46 = vld [vmem:[%s0 + $0x80] sm:$0xff]
  %v47 = vld [vmem:[%s0 + $0x88] sm:$0xff]
  %v48 = vld [vmem:[%s0 + $0x90] sm:$0xff]
  %v49 = vld [vmem:[%s0 + $0x98] sm:$0xff]
  %v50 = vld [vmem:[%s0 + $0xa0] sm:$0xff]
  %v51 = vld [vmem:[%s0 + $0xa8] sm:$0xff]
  %v52 = vld [vmem:[%s0 + $0xb0] sm:$0xff]
  %v53 = vld [vmem:[%s0 + $0xb8] sm:$0xff]
  %v54 = vld [vmem:[%s0 + $0xc0] sm:$0xff]
  %v55 = vld [vmem:[%s0 + $0xc8] sm:$0xff]
  %v56 = vld [vmem:[%s0 + $0xd0] sm:$0xff]
  %v57 = vld [vmem:[%s0 + $0xd8] sm:$0xff]
  %v58 = vld [vmem:[%s0 + $0xe0] sm:$0xff]
  %v59 = vld [vmem:[%s0 + $0xe8] sm:$0xff]
  %v60 = vld [vmem:[%s0 + $0xf0] sm:$0xff]
  %v61 = vld [vmem:[%s0 + $0xf8] sm:$0xff]
  %v62 = vld [vmem:[%s1] sm:$0xf]
  %v63 = vld [vmem:[%s1 + $0x4] sm:$0xf]
  %v64 = vld [vmem:[%s1 + $0x8] sm:$0xf]
  %v65 = vld [vmem:[%s1 + $0xc] sm:$0xf]
  %v66 = vld [vmem:[%s1 + $0x10] sm:$0xf]
  %v67 = vld [vmem:[%s1 + $0x14] sm:$0xf]
  %v68 = vld [vmem:[%s1 + $0x18] sm:$0xf]
  %v69 = vld [vmem:[%s1 + $0x1c] sm:$0xf]
  %v70 = vld [vmem:[%s1 + $0x20] sm:$0xf]
  %v71 = vld [vmem:[%s1 + $0x24] sm:$0xf]
  %v72 = vld [vmem:[%s1 + $0x28] sm:$0xf]
  %v73 = vld [vmem:[%s1 + $0x2c] sm:$0xf]
  %v74 = vld [vmem:[%s1 + $0x30] sm:$0xf]
  %v75 = vld [vmem:[%s1 + $0x34] sm:$0xf]
  %v76 = vld [vmem:[%s1 + $0x38] sm:$0xf]
  %v77 = vld [vmem:[%s1 + $0x3c] sm:$0xf]
  %v78 = vld [vmem:[%s1 + $0x40] sm:$0xf]
  %v79 = vld [vmem:[%s1 + $0x44] sm:$0xf]
  %v80 = vld [vmem:[%s1 + $0x48] sm:$0xf]
  %v81 = vld [vmem:[%s1 + $0x4c] sm:$0xf]
  %v82 = vld [vmem:[%s1 + $0x50] sm:$0xf]
  %v83 = vld [vmem:[%s1 + $0x54] sm:$0xf]
  %v84 = vld [vmem:[%s1 + $0x58] sm:$0xf]
  %v85 = vld [vmem:[%s1 + $0x5c] sm:$0xf]
  %v86 = vld [vmem:[%s1 + $0x60] sm:$0xf]
  %v87 = vld [vmem:[%s1 + $0x64] sm:$0xf]
  %v88 = vld [vmem:[%s1 + $0x68] sm:$0xf]
  %v89 = vld [vmem:[%s1 + $0x6c] sm:$0xf]
  %v90 = vld [vmem:[%s1 + $0x70] sm:$0xf]
  %v91 = vld [vmem:[%s1 + $0x74] sm:$0xf]
  %v92 = vld [vmem:[%s1 + $0x78] sm:$0xf]
  %v93 = vld [vmem:[%s1 + $0x7c] sm:$0xf]
  %v94 = vld [vmem:[%s2] sm:$0xf]
  %v95 = vld [vmem:[%s2 + $0x4] sm:$0xf]
  %v96 = vld [vmem:[%s2 + $0x8] sm:$0xf]
  %v97 = vld [vmem:[%s2 + $0xc] sm:$0xf]
  %v98 = vld [vmem:[%s2 + $0x10] sm:$0xf]
  %v99 = vld [vmem:[%s2 + $0x14] sm:$0xf]
  %v100 = vld [vmem:[%s2 + $0x18] sm:$0xf]
  %v101 = vld [vmem:[%s2 + $0x1c] sm:$0xf]
  %v102 = vld [vmem:[%s2 + $0x20] sm:$0xf]
  %v103 = vld [vmem:[%s2 + $0x24] sm:$0xf]
  %v104 = vld [vmem:[%s2 + $0x28] sm:$0xf]
  %v105 = vld [vmem:[%s2 + $0x2c] sm:$0xf]
  %v106 = vld [vmem:[%s2 + $0x30] sm:$0xf]
  %v107 = vld [vmem:[%s2 + $0x34] sm:$0xf]
  %v108 = vld [vmem:[%s2 + $0x38] sm:$0xf]
  %v109 = vld [vmem:[%s2 + $0x3c] sm:$0xf]
  %v142 = vunpack.c.l.b16 %v62
  %v143 = vunpack.c.l.b16 %v63
  %v144 = vunpack.c.l.b16 %v64
  %v145 = vunpack.c.l.b16 %v65
  %v146 = vunpack.c.l.b16 %v66
  %v147 = vunpack.c.l.b16 %v67
  %v148 = vunpack.c.l.b16 %v68
  %v149 = vunpack.c.l.b16 %v69
  %v150 = vunpack.c.l.b16 %v70
  %v151 = vunpack.c.l.b16 %v71
  %v152 = vunpack.c.l.b16 %v72
  %v153 = vunpack.c.l.b16 %v73
  %v154 = vunpack.c.l.b16 %v74
  %v155 = vunpack.c.l.b16 %v75
  %v156 = vunpack.c.l.b16 %v76
  %v157 = vunpack.c.l.b16 %v77
  %v158 = vunpack.c.l.b16 %v78
  %v159 = vunpack.c.l.b16 %v79
  %v160 = vunpack.c.l.b16 %v80
  %v161 = vunpack.c.l.b16 %v81
  %v162 = vunpack.c.l.b16 %v82
  %v163 = vunpack.c.l.b16 %v83
  %v164 = vunpack.c.l.b16 %v84
  %v165 = vunpack.c.l.b16 %v85
  %v166 = vunpack.c.l.b16 %v86
  %v167 = vunpack.c.l.b16 %v87
  %v168 = vunpack.c.l.b16 %v88
  %v169 = vunpack.c.l.b16 %v89
  %v170 = vunpack.c.l.b16 %v90
  %v171 = vunpack.c.l.b16 %v91
  %v172 = vunpack.c.l.b16 %v92
  %v173 = vunpack.c.l.b16 %v93
  %v174 = vpack.c.b16 %v143, %v142
  %v175 = vpack.c.b16 %v145, %v144
  %v176 = vpack.c.b16 %v147, %v146
  %v177 = vpack.c.b16 %v149, %v148
  %v178 = vpack.c.b16 %v151, %v150
  %v179 = vpack.c.b16 %v153, %v152
  %v180 = vpack.c.b16 %v155, %v154
  %v181 = vpack.c.b16 %v157, %v156
  %v182 = vpack.c.b16 %v159, %v158
  %v183 = vpack.c.b16 %v161, %v160
  %v184 = vpack.c.b16 %v163, %v162
  %v185 = vpack.c.b16 %v165, %v164
  %v186 = vpack.c.b16 %v167, %v166
  %v187 = vpack.c.b16 %v169, %v168
  %v188 = vpack.c.b16 %v171, %v170
  %v189 = vpack.c.b16 %v173, %v172
  %v222 = vunpack.c.l.b16 %v94
  %v223 = vunpack.c.l.b16 %v95
  %v224 = vunpack.c.l.b16 %v96
  %v225 = vunpack.c.l.b16 %v97
  %v226 = vunpack.c.l.b16 %v98
  %v227 = vunpack.c.l.b16 %v99
  %v228 = vunpack.c.l.b16 %v100
  %v229 = vunpack.c.l.b16 %v101
  %v230 = vunpack.c.l.b16 %v102
  %v231 = vunpack.c.l.b16 %v103
  %v232 = vunpack.c.l.b16 %v104
  %v233 = vunpack.c.l.b16 %v105
  %v234 = vunpack.c.l.b16 %v106
  %v235 = vunpack.c.l.b16 %v107
  %v236 = vunpack.c.l.b16 %v108
  %v237 = vunpack.c.l.b16 %v109
  %v238 = vpack.c.b16 %v223, %v222
  %v239 = vpack.c.b16 %v225, %v224
  %v240 = vpack.c.b16 %v227, %v226
  %v241 = vpack.c.b16 %v229, %v228
  %v242 = vpack.c.b16 %v231, %v230
  %v243 = vpack.c.b16 %v233, %v232
  %v244 = vpack.c.b16 %v235, %v234
  %v245 = vpack.c.b16 %v237, %v236
  %254 = vmatprep.subr.bf16.mxu0 0
  %255 = vmatpush1.bf16.msra.mxu0 %v238
  %256 = vmatprep.subr.bf16.mxu0 0
  %257 = vmatpush1.bf16.msra.mxu0 %v239
  %258 = vmatprep.subr.bf16.mxu0 0
  %259 = vmatpush1.bf16.msra.mxu0 %v240
  %260 = vmatprep.subr.bf16.mxu0 0
  %261 = vmatpush1.bf16.msra.mxu0 %v241
  %262 = vmatprep.subr.bf16.mxu0 0
  %263 = vmatpush1.bf16.msra.mxu0 %v242
  %264 = vmatprep.subr.bf16.mxu0 0
  %265 = vmatpush1.bf16.msra.mxu0 %v243
  %266 = vmatprep.subr.bf16.mxu0 0
  %267 = vmatpush1.bf16.msra.mxu0 %v244
  %268 = vmatprep.subr.bf16.mxu0 0
  %269 = vmatpush1.bf16.msra.mxu0 %v245
  %270 = vmatprep.subr.bf16.mxu0 0
  %271 = vmatpush1.bf16.msra.mxu0 0
  %272 = vmatprep.subr.bf16.mxu0 0
  %273 = vmatpush1.bf16.msra.mxu0 0
  %274 = vmatprep.subr.bf16.mxu0 0
  %275 = vmatpush1.bf16.msra.mxu0 0
  %276 = vmatprep.subr.bf16.mxu0 0
  %277 = vmatpush1.bf16.msra.mxu0 0
  %278 = vmatprep.subr.bf16.mxu0 0
  %279 = vmatpush1.bf16.msra.mxu0 0
  %280 = vmatprep.subr.bf16.mxu0 0
  %281 = vmatpush1.bf16.msra.mxu0 0
  %282 = vmatprep.subr.bf16.mxu0 0
  %283 = vmatpush1.bf16.msra.mxu0 0
  %284 = vmatprep.subr.bf16.mxu0 0
  %285 = vmatpush1.bf16.msra.mxu0 0
  %286 = vmatprep.mubr.bf16.mxu0 0
  %287 = vmatmul.mubr.bf16.gmra.mrb[0].mxu0 %v174
  %v288 = vpop.f32.mrb[0].mxu0
  %v289 = vadd.f32 0.0, %v288
  %v290 = vpop.f32.mrb[0].mxu0
  %v291 = vpop.f32.mrb[0].mxu0
  %v292 = vadd.f32 0.0, %v291
  %v293 = vpop.f32.mrb[0].mxu0
  %294 = vmatprep.mubr.bf16.mxu0 0
  %295 = vmatmul.mubr.bf16.gmra.mrb[0].mxu0 %v175
  %v296 = vpop.f32.mrb[0].mxu0
  %v297 = vadd.f32 0.0, %v296
  %v298 = vpop.f32.mrb[0].mxu0
  %v299 = vpop.f32.mrb[0].mxu0
  %v300 = vadd.f32 0.0, %v299
  %v301 = vpop.f32.mrb[0].mxu0
  %302 = vmatprep.mubr.bf16.mxu0 0
  %303 = vmatmul.mubr.bf16.gmra.mrb[0].mxu0 %v176
  %v304 = vpop.f32.mrb[0].mxu0
  %v305 = vadd.f32 0.0, %v304
  %v306 = vpop.f32.mrb[0].mxu0
  %v307 = vpop.f32.mrb[0].mxu0
  %v308 = vadd.f32 0.0, %v307
  %v309 = vpop.f32.mrb[0].mxu0
  %310 = vmatprep.mubr.bf16.mxu0 0
  %311 = vmatmul.mubr.bf16.gmra.mrb[0].mxu0 %v177
  %v312 = vpop.f32.mrb[0].mxu0
  %v313 = vadd.f32 0.0, %v312
  %v314 = vpop.f32.mrb[0].mxu0
  %v315 = vpop.f32.mrb[0].mxu0
  %v316 = vadd.f32 0.0, %v315
  %v317 = vpop.f32.mrb[0].mxu0
  %318 = vmatprep.mubr.bf16.mxu0 0
  %319 = vmatmul.mubr.bf16.gmra.mrb[0].mxu0 %v178
  %v320 = vpop.f32.mrb[0].mxu0
  %v321 = vadd.f32 0.0, %v320
  %v322 = vpop.f32.mrb[0].mxu0
  %v323 = vpop.f32.mrb[0].mxu0
  %v324 = vadd.f32 0.0, %v323
  %v325 = vpop.f32.mrb[0].mxu0
  %326 = vmatprep.mubr.bf16.mxu0 0
  %327 = vmatmul.mubr.bf16.gmra.mrb[0].mxu0 %v179
  %v328 = vpop.f32.mrb[0].mxu0
  %v329 = vadd.f32 0.0, %v328
  %v330 = vpop.f32.mrb[0].mxu0
  %v331 = vpop.f32.mrb[0].mxu0
  %v332 = vadd.f32 0.0, %v331
  %v333 = vpop.f32.mrb[0].mxu0
  %334 = vmatprep.mubr.bf16.mxu0 0
  %335 = vmatmul.mubr.bf16.gmra.mrb[0].mxu0 %v180
  %v336 = vpop.f32.mrb[0].mxu0
  %v337 = vadd.f32 0.0, %v336
  %v338 = vpop.f32.mrb[0].mxu0
  %v339 = vpop.f32.mrb[0].mxu0
  %v340 = vadd.f32 0.0, %v339
  %v341 = vpop.f32.mrb[0].mxu0
  %342 = vmatprep.mubr.bf16.mxu0 0
  %343 = vmatmul.mubr.bf16.gmra.mrb[0].mxu0 %v181
  %v344 = vpop.f32.mrb[0].mxu0
  %v345 = vadd.f32 0.0, %v344
  %v346 = vpop.f32.mrb[0].mxu0
  %v347 = vpop.f32.mrb[0].mxu0
  %v348 = vadd.f32 0.0, %v347
  %v349 = vpop.f32.mrb[0].mxu0
  %350 = vmatprep.mubr.bf16.mxu0 0
  %351 = vmatmul.mubr.bf16.gmra.mrb[0].mxu0 %v182
  %v352 = vpop.f32.mrb[0].mxu0
  %v353 = vadd.f32 0.0, %v352
  %v354 = vpop.f32.mrb[0].mxu0
  %v355 = vpop.f32.mrb[0].mxu0
  %v356 = vadd.f32 0.0, %v355
  %v357 = vpop.f32.mrb[0].mxu0
  %358 = vmatprep.mubr.bf16.mxu0 0
  %359 = vmatmul.mubr.bf16.gmra.mrb[0].mxu0 %v183
  %v360 = vpop.f32.mrb[0].mxu0
  %v361 = vadd.f32 0.0, %v360
  %v362 = vpop.f32.mrb[0].mxu0
  %v363 = vpop.f32.mrb[0].mxu0
  %v364 = vadd.f32 0.0, %v363
  %v365 = vpop.f32.mrb[0].mxu0
  %366 = vmatprep.mubr.bf16.mxu0 0
  %367 = vmatmul.mubr.bf16.gmra.mrb[0].mxu0 %v184
  %v368 = vpop.f32.mrb[0].mxu0
  %v369 = vadd.f32 0.0, %v368
  %v370 = vpop.f32.mrb[0].mxu0
  %v371 = vpop.f32.mrb[0].mxu0
  %v372 = vadd.f32 0.0, %v371
  %v373 = vpop.f32.mrb[0].mxu0
  %374 = vmatprep.mubr.bf16.mxu0 0
  %375 = vmatmul.mubr.bf16.gmra.mrb[0].mxu0 %v185
  %v376 = vpop.f32.mrb[0].mxu0
  %v377 = vadd.f32 0.0, %v376
  %v378 = vpop.f32.mrb[0].mxu0
  %v379 = vpop.f32.mrb[0].mxu0
  %v380 = vadd.f32 0.0, %v379
  %v381 = vpop.f32.mrb[0].mxu0
  %382 = vmatprep.mubr.bf16.mxu0 0
  %383 = vmatmul.mubr.bf16.gmra.mrb[0].mxu0 %v186
  %v384 = vpop.f32.mrb[0].mxu0
  %v385 = vadd.f32 0.0, %v384
  %v386 = vpop.f32.mrb[0].mxu0
  %v387 = vpop.f32.mrb[0].mxu0
  %v388 = vadd.f32 0.0, %v387
  %v389 = vpop.f32.mrb[0].mxu0
  %390 = vmatprep.mubr.bf16.mxu0 0
  %391 = vmatmul.mubr.bf16.gmra.mrb[0].mxu0 %v187
  %v392 = vpop.f32.mrb[0].mxu0
  %v393 = vadd.f32 0.0, %v392
  %v394 = vpop.f32.mrb[0].mxu0
  %v395 = vpop.f32.mrb[0].mxu0
  %v396 = vadd.f32 0.0, %v395
  %v397 = vpop.f32.mrb[0].mxu0
  %398 = vmatprep.mubr.bf16.mxu0 0
  %399 = vmatmul.mubr.bf16.gmra.mrb[0].mxu0 %v188
  %v400 = vpop.f32.mrb[0].mxu0
  %v401 = vadd.f32 0.0, %v400
  %v402 = vpop.f32.mrb[0].mxu0
  %v403 = vpop.f32.mrb[0].mxu0
  %v404 = vadd.f32 0.0, %v403
  %v405 = vpop.f32.mrb[0].mxu0
  %406 = vmatprep.mubr.bf16.mxu0 0
  %407 = vmatmul.mubr.bf16.gmra.mrb[0].mxu0 %v189
  %v408 = vpop.f32.mrb[0].mxu0
  %v409 = vadd.f32 0.0, %v408
  %v410 = vpop.f32.mrb[0].mxu0
  %v411 = vpop.f32.mrb[0].mxu0
  %v412 = vadd.f32 0.0, %v411
  %v413 = vpop.f32.mrb[0].mxu0
  %414 = vdwg.mxu0
  %v415 = vpack.c.bf16 %v292, %v289
  %v416 = vpack.c.bf16 %v300, %v297
  %v417 = vpack.c.bf16 %v308, %v305
  %v418 = vpack.c.bf16 %v316, %v313
  %v419 = vpack.c.bf16 %v324, %v321
  %v420 = vpack.c.bf16 %v332, %v329
  %v421 = vpack.c.bf16 %v340, %v337
  %v422 = vpack.c.bf16 %v348, %v345
  %v423 = vpack.c.bf16 %v356, %v353
  %v424 = vpack.c.bf16 %v364, %v361
  %v425 = vpack.c.bf16 %v372, %v369
  %v426 = vpack.c.bf16 %v380, %v377
  %v427 = vpack.c.bf16 %v388, %v385
  %v428 = vpack.c.bf16 %v396, %v393
  %v429 = vpack.c.bf16 %v404, %v401
  %v430 = vpack.c.bf16 %v412, %v409
  %v431 = vld [vmem:[%s3] sm:$0x1]
  %v433 = vlaneseq
  %v434 = vshrl.u32 %v433, 7
  %v435 = vsub.s32 0, %v434
  %v436 = vrot.slane %v431, %v435
  %v470 = vunpack.c.l.b16 %v30
  %v471 = vunpack.c.h.b16 %v30
  %v472 = vunpack.c.l.b16 %v31
  %v473 = vunpack.c.h.b16 %v31
  %v474 = vunpack.c.l.b16 %v32
  %v475 = vunpack.c.h.b16 %v32
  %v476 = vunpack.c.l.b16 %v33
  %v477 = vunpack.c.h.b16 %v33
  %v478 = vunpack.c.l.b16 %v34
  %v479 = vunpack.c.h.b16 %v34
  %v480 = vunpack.c.l.b16 %v35
  %v481 = vunpack.c.h.b16 %v35
  %v482 = vunpack.c.l.b16 %v36
  %v483 = vunpack.c.h.b16 %v36
  %v484 = vunpack.c.l.b16 %v37
  %v485 = vunpack.c.h.b16 %v37
  %v486 = vunpack.c.l.b16 %v38
  %v487 = vunpack.c.h.b16 %v38
  %v488 = vunpack.c.l.b16 %v39
  %v489 = vunpack.c.h.b16 %v39
  %v490 = vunpack.c.l.b16 %v40
  %v491 = vunpack.c.h.b16 %v40
  %v492 = vunpack.c.l.b16 %v41
  %v493 = vunpack.c.h.b16 %v41
  %v494 = vunpack.c.l.b16 %v42
  %v495 = vunpack.c.h.b16 %v42
  %v496 = vunpack.c.l.b16 %v43
  %v497 = vunpack.c.h.b16 %v43
  %v498 = vunpack.c.l.b16 %v44
  %v499 = vunpack.c.h.b16 %v44
  %v500 = vunpack.c.l.b16 %v45
  %v501 = vunpack.c.h.b16 %v45
  %v502 = vunpack.c.l.b16 %v46
  %v503 = vunpack.c.h.b16 %v46
  %v504 = vunpack.c.l.b16 %v47
  %v505 = vunpack.c.h.b16 %v47
  %v506 = vunpack.c.l.b16 %v48
  %v507 = vunpack.c.h.b16 %v48
  %v508 = vunpack.c.l.b16 %v49
  %v509 = vunpack.c.h.b16 %v49
  %v510 = vunpack.c.l.b16 %v50
  %v511 = vunpack.c.h.b16 %v50
  %v512 = vunpack.c.l.b16 %v51
  %v513 = vunpack.c.h.b16 %v51
  %v514 = vunpack.c.l.b16 %v52
  %v515 = vunpack.c.h.b16 %v52
  %v516 = vunpack.c.l.b16 %v53
  %v517 = vunpack.c.h.b16 %v53
  %v518 = vunpack.c.l.b16 %v54
  %v519 = vunpack.c.h.b16 %v54
  %v520 = vunpack.c.l.b16 %v55
  %v521 = vunpack.c.h.b16 %v55
  %v522 = vunpack.c.l.b16 %v56
  %v523 = vunpack.c.h.b16 %v56
  %v524 = vunpack.c.l.b16 %v57
  %v525 = vunpack.c.h.b16 %v57
  %v526 = vunpack.c.l.b16 %v58
  %v527 = vunpack.c.h.b16 %v58
  %v528 = vunpack.c.l.b16 %v59
  %v529 = vunpack.c.h.b16 %v59
  %v530 = vunpack.c.l.b16 %v60
  %v531 = vunpack.c.h.b16 %v60
  %v532 = vunpack.c.l.b16 %v61
  %v533 = vunpack.c.h.b16 %v61
  %v534 = vpack.c.b16 %v472, %v470
  %v535 = vpack.c.b16 %v473, %v471
  %v536 = vpack.c.b16 %v476, %v474
  %v537 = vpack.c.b16 %v477, %v475
  %v538 = vpack.c.b16 %v480, %v478
  %v539 = vpack.c.b16 %v481, %v479
  %v540 = vpack.c.b16 %v484, %v482
  %v541 = vpack.c.b16 %v485, %v483
  %v542 = vpack.c.b16 %v488, %v486
  %v543 = vpack.c.b16 %v489, %v487
  %v544 = vpack.c.b16 %v492, %v490
  %v545 = vpack.c.b16 %v493, %v491
  %v546 = vpack.c.b16 %v496, %v494
  %v547 = vpack.c.b16 %v497, %v495
  %v548 = vpack.c.b16 %v500, %v498
  %v549 = vpack.c.b16 %v501, %v499
  %v550 = vpack.c.b16 %v504, %v502
  %v551 = vpack.c.b16 %v505, %v503
  %v552 = vpack.c.b16 %v508, %v506
  %v553 = vpack.c.b16 %v509, %v507
  %v554 = vpack.c.b16 %v512, %v510
  %v555 = vpack.c.b16 %v513, %v511
  %v556 = vpack.c.b16 %v516, %v514
  %v557 = vpack.c.b16 %v517, %v515
  %v558 = vpack.c.b16 %v520, %v518
  %v559 = vpack.c.b16 %v521, %v519
  %v560 = vpack.c.b16 %v524, %v522
  %v561 = vpack.c.b16 %v525, %v523
  %v562 = vpack.c.b16 %v528, %v526
  %v563 = vpack.c.b16 %v529, %v527
  %v564 = vpack.c.b16 %v532, %v530
  %v565 = vpack.c.b16 %v533, %v531
  %598 = vmatprep.subr.bf16.mxu0 0
  %599 = vmatpush1.bf16.msra.mxu0 %v415
  %600 = vmatprep.subr.bf16.mxu0 0
  %601 = vmatpush1.bf16.msra.mxu0 %v416
  %602 = vmatprep.subr.bf16.mxu0 0
  %603 = vmatpush1.bf16.msra.mxu0 %v417
  %604 = vmatprep.subr.bf16.mxu0 0
  %605 = vmatpush1.bf16.msra.mxu0 %v418
  %606 = vmatprep.subr.bf16.mxu0 0
  %607 = vmatpush1.bf16.msra.mxu0 %v419
  %608 = vmatprep.subr.bf16.mxu0 0
  %609 = vmatpush1.bf16.msra.mxu0 %v420
  %610 = vmatprep.subr.bf16.mxu0 0
  %611 = vmatpush1.bf16.msra.mxu0 %v421
  %612 = vmatprep.subr.bf16.mxu0 0
  %613 = vmatpush1.bf16.msra.mxu0 %v422
  %614 = vmatprep.subr.bf16.mxu0 0
  %615 = vmatpush1.bf16.msra.mxu0 %v423
  %616 = vmatprep.subr.bf16.mxu0 0
  %617 = vmatpush1.bf16.msra.mxu0 %v424
  %618 = vmatprep.subr.bf16.mxu0 0
  %619 = vmatpush1.bf16.msra.mxu0 %v425
  %620 = vmatprep.subr.bf16.mxu0 0
  %621 = vmatpush1.bf16.msra.mxu0 %v426
  %622 = vmatprep.subr.bf16.mxu0 0
  %623 = vmatpush1.bf16.msra.mxu0 %v427
  %624 = vmatprep.subr.bf16.mxu0 0
  %625 = vmatpush1.bf16.msra.mxu0 %v428
  %626 = vmatprep.subr.bf16.mxu0 0
  %627 = vmatpush1.bf16.msra.mxu0 %v429
  %628 = vmatprep.subr.bf16.mxu0 0
  %629 = vmatpush1.bf16.msra.mxu0 %v430
  %630 = vmatprep.mubr.bf16.mxu0 %v535
  %631 = vmatmul.mubr.bf16.gmra.mrb[0].mxu0 %v534
  %v632 = vpop.f32.mrb[0].mxu0
  %v633 = vadd.f32 %v436, %v632
  %v634 = vpop.f32.mrb[0].mxu0
  %v635 = vpop.f32.mrb[0].mxu0
  %v636 = vadd.f32 %v436, %v635
  %v637 = vpop.f32.mrb[0].mxu0
  %638 = vmatprep.mubr.bf16.mxu0 %v537
  %639 = vmatmul.mubr.bf16.gmra.mrb[0].mxu0 %v536
  %v640 = vpop.f32.mrb[0].mxu0
  %v641 = vadd.f32 %v436, %v640
  %v642 = vpop.f32.mrb[0].mxu0
  %v643 = vpop.f32.mrb[0].mxu0
  %v644 = vadd.f32 %v436, %v643
  %v645 = vpop.f32.mrb[0].mxu0
  %646 = vmatprep.mubr.bf16.mxu0 %v539
  %647 = vmatmul.mubr.bf16.gmra.mrb[0].mxu0 %v538
  %v648 = vpop.f32.mrb[0].mxu0
  %v649 = vadd.f32 %v436, %v648
  %v650 = vpop.f32.mrb[0].mxu0
  %v651 = vpop.f32.mrb[0].mxu0
  %v652 = vadd.f32 %v436, %v651
  %v653 = vpop.f32.mrb[0].mxu0
  %654 = vmatprep.mubr.bf16.mxu0 %v541
  %655 = vmatmul.mubr.bf16.gmra.mrb[0].mxu0 %v540
  %v656 = vpop.f32.mrb[0].mxu0
  %v657 = vadd.f32 %v436, %v656
  %v658 = vpop.f32.mrb[0].mxu0
  %v659 = vpop.f32.mrb[0].mxu0
  %v660 = vadd.f32 %v436, %v659
  %v661 = vpop.f32.mrb[0].mxu0
  %662 = vmatprep.mubr.bf16.mxu0 %v543
  %663 = vmatmul.mubr.bf16.gmra.mrb[0].mxu0 %v542
  %v664 = vpop.f32.mrb[0].mxu0
  %v665 = vadd.f32 %v436, %v664
  %v666 = vpop.f32.mrb[0].mxu0
  %v667 = vpop.f32.mrb[0].mxu0
  %v668 = vadd.f32 %v436, %v667
  %v669 = vpop.f32.mrb[0].mxu0
  %670 = vmatprep.mubr.bf16.mxu0 %v545
  %671 = vmatmul.mubr.bf16.gmra.mrb[0].mxu0 %v544
  %v672 = vpop.f32.mrb[0].mxu0
  %v673 = vadd.f32 %v436, %v672
  %v674 = vpop.f32.mrb[0].mxu0
  %v675 = vpop.f32.mrb[0].mxu0
  %v676 = vadd.f32 %v436, %v675
  %v677 = vpop.f32.mrb[0].mxu0
  %678 = vmatprep.mubr.bf16.mxu0 %v547
  %679 = vmatmul.mubr.bf16.gmra.mrb[0].mxu0 %v546
  %v680 = vpop.f32.mrb[0].mxu0
  %v681 = vadd.f32 %v436, %v680
  %v682 = vpop.f32.mrb[0].mxu0
  %v683 = vpop.f32.mrb[0].mxu0
  %v684 = vadd.f32 %v436, %v683
  %v685 = vpop.f32.mrb[0].mxu0
  %686 = vmatprep.mubr.bf16.mxu0 %v549
  %687 = vmatmul.mubr.bf16.gmra.mrb[0].mxu0 %v548
  %v688 = vpop.f32.mrb[0].mxu0
  %v689 = vadd.f32 %v436, %v688
  %v690 = vpop.f32.mrb[0].mxu0
  %v691 = vpop.f32.mrb[0].mxu0
  %v692 = vadd.f32 %v436, %v691
  %v693 = vpop.f32.mrb[0].mxu0
  %694 = vmatprep.mubr.bf16.mxu0 %v551
  %695 = vmatmul.mubr.bf16.gmra.mrb[0].mxu0 %v550
  %v696 = vpop.f32.mrb[0].mxu0
  %v697 = vadd.f32 %v436, %v696
  %v698 = vpop.f32.mrb[0].mxu0
  %v699 = vpop.f32.mrb[0].mxu0
  %v700 = vadd.f32 %v436, %v699
  %v701 = vpop.f32.mrb[0].mxu0
  %702 = vmatprep.mubr.bf16.mxu0 %v553
  %703 = vmatmul.mubr.bf16.gmra.mrb[0].mxu0 %v552
  %v704 = vpop.f32.mrb[0].mxu0
  %v705 = vadd.f32 %v436, %v704
  %v706 = vpop.f32.mrb[0].mxu0
  %v707 = vpop.f32.mrb[0].mxu0
  %v708 = vadd.f32 %v436, %v707
  %v709 = vpop.f32.mrb[0].mxu0
  %710 = vmatprep.mubr.bf16.mxu0 %v555
  %711 = vmatmul.mubr.bf16.gmra.mrb[0].mxu0 %v554
  %v712 = vpop.f32.mrb[0].mxu0
  %v713 = vadd.f32 %v436, %v712
  %v714 = vpop.f32.mrb[0].mxu0
  %v715 = vpop.f32.mrb[0].mxu0
  %v716 = vadd.f32 %v436, %v715
  %v717 = vpop.f32.mrb[0].mxu0
  %718 = vmatprep.mubr.bf16.mxu0 %v557
  %719 = vmatmul.mubr.bf16.gmra.mrb[0].mxu0 %v556
  %v720 = vpop.f32.mrb[0].mxu0
  %v721 = vadd.f32 %v436, %v720
  %v722 = vpop.f32.mrb[0].mxu0
  %v723 = vpop.f32.mrb[0].mxu0
  %v724 = vadd.f32 %v436, %v723
  %v725 = vpop.f32.mrb[0].mxu0
  %726 = vmatprep.mubr.bf16.mxu0 %v559
  %727 = vmatmul.mubr.bf16.gmra.mrb[0].mxu0 %v558
  %v728 = vpop.f32.mrb[0].mxu0
  %v729 = vadd.f32 %v436, %v728
  %v730 = vpop.f32.mrb[0].mxu0
  %v731 = vpop.f32.mrb[0].mxu0
  %v732 = vadd.f32 %v436, %v731
  %v733 = vpop.f32.mrb[0].mxu0
  %734 = vmatprep.mubr.bf16.mxu0 %v561
  %735 = vmatmul.mubr.bf16.gmra.mrb[0].mxu0 %v560
  %v736 = vpop.f32.mrb[0].mxu0
  %v737 = vadd.f32 %v436, %v736
  %v738 = vpop.f32.mrb[0].mxu0
  %v739 = vpop.f32.mrb[0].mxu0
  %v740 = vadd.f32 %v436, %v739
  %v741 = vpop.f32.mrb[0].mxu0
  %742 = vmatprep.mubr.bf16.mxu0 %v563
  %743 = vmatmul.mubr.bf16.gmra.mrb[0].mxu0 %v562
  %v744 = vpop.f32.mrb[0].mxu0
  %v745 = vadd.f32 %v436, %v744
  %v746 = vpop.f32.mrb[0].mxu0
  %v747 = vpop.f32.mrb[0].mxu0
  %v748 = vadd.f32 %v436, %v747
  %v749 = vpop.f32.mrb[0].mxu0
  %750 = vmatprep.mubr.bf16.mxu0 %v565
  %751 = vmatmul.mubr.bf16.gmra.mrb[0].mxu0 %v564
  %v752 = vpop.f32.mrb[0].mxu0
  %v753 = vadd.f32 %v436, %v752
  %v754 = vpop.f32.mrb[0].mxu0
  %v755 = vpop.f32.mrb[0].mxu0
  %v756 = vadd.f32 %v436, %v755
  %v757 = vpop.f32.mrb[0].mxu0
  %758 = vdwg.mxu0
  %v759 = vmax.f32 %v633, 0.0
  %v760 = vmax.f32 %v636, 0.0
  %v761 = vmax.f32 %v641, 0.0
  %v762 = vmax.f32 %v644, 0.0
  %v763 = vmax.f32 %v649, 0.0
  %v764 = vmax.f32 %v652, 0.0
  %v765 = vmax.f32 %v657, 0.0
  %v766 = vmax.f32 %v660, 0.0
  %v767 = vmax.f32 %v665, 0.0
  %v768 = vmax.f32 %v668, 0.0
  %v769 = vmax.f32 %v673, 0.0
  %v770 = vmax.f32 %v676, 0.0
  %v771 = vmax.f32 %v681, 0.0
  %v772 = vmax.f32 %v684, 0.0
  %v773 = vmax.f32 %v689, 0.0
  %v774 = vmax.f32 %v692, 0.0
  %v775 = vmax.f32 %v697, 0.0
  %v776 = vmax.f32 %v700, 0.0
  %v777 = vmax.f32 %v705, 0.0
  %v778 = vmax.f32 %v708, 0.0
  %v779 = vmax.f32 %v713, 0.0
  %v780 = vmax.f32 %v716, 0.0
  %v781 = vmax.f32 %v721, 0.0
  %v782 = vmax.f32 %v724, 0.0
  %v783 = vmax.f32 %v729, 0.0
  %v784 = vmax.f32 %v732, 0.0
  %v785 = vmax.f32 %v737, 0.0
  %v786 = vmax.f32 %v740, 0.0
  %v787 = vmax.f32 %v745, 0.0
  %v788 = vmax.f32 %v748, 0.0
  %v789 = vmax.f32 %v753, 0.0
  %v790 = vmax.f32 %v756, 0.0
  %v791 = vpack.c.bf16 %v760, %v759
  %v792 = vpack.c.bf16 %v762, %v761
  %v793 = vpack.c.bf16 %v764, %v763
  %v794 = vpack.c.bf16 %v766, %v765
  %v795 = vpack.c.bf16 %v768, %v767
  %v796 = vpack.c.bf16 %v770, %v769
  %v797 = vpack.c.bf16 %v772, %v771
  %v798 = vpack.c.bf16 %v774, %v773
  %v799 = vpack.c.bf16 %v776, %v775
  %v800 = vpack.c.bf16 %v778, %v777
  %v801 = vpack.c.bf16 %v780, %v779
  %v802 = vpack.c.bf16 %v782, %v781
  %v803 = vpack.c.bf16 %v784, %v783
  %v804 = vpack.c.bf16 %v786, %v785
  %v805 = vpack.c.bf16 %v788, %v787
  %v806 = vpack.c.bf16 %v790, %v789
  %v807 = vld [vmem:[%s4] sm:$0xf]
  %v808 = vld [vmem:[%s4 + $0x4] sm:$0xf]
  %v809 = vld [vmem:[%s4 + $0x8] sm:$0xf]
  %v810 = vld [vmem:[%s4 + $0xc] sm:$0xf]
  %v811 = vld [vmem:[%s4 + $0x10] sm:$0xf]
  %v812 = vld [vmem:[%s4 + $0x14] sm:$0xf]
  %v813 = vld [vmem:[%s4 + $0x18] sm:$0xf]
  %v814 = vld [vmem:[%s4 + $0x1c] sm:$0xf]
  %v815 = vld [vmem:[%s4 + $0x20] sm:$0xf]
  %v816 = vld [vmem:[%s4 + $0x24] sm:$0xf]
  %v817 = vld [vmem:[%s4 + $0x28] sm:$0xf]
  %v818 = vld [vmem:[%s4 + $0x2c] sm:$0xf]
  %v819 = vld [vmem:[%s4 + $0x30] sm:$0xf]
  %v820 = vld [vmem:[%s4 + $0x34] sm:$0xf]
  %v821 = vld [vmem:[%s4 + $0x38] sm:$0xf]
  %v822 = vld [vmem:[%s4 + $0x3c] sm:$0xf]
  %v839 = vunpack.c.l.b16 %v807
  %v840 = vunpack.c.l.b16 %v808
  %v841 = vunpack.c.l.b16 %v809
  %v842 = vunpack.c.l.b16 %v810
  %v843 = vunpack.c.l.b16 %v811
  %v844 = vunpack.c.l.b16 %v812
  %v845 = vunpack.c.l.b16 %v813
  %v846 = vunpack.c.l.b16 %v814
  %v847 = vunpack.c.l.b16 %v815
  %v848 = vunpack.c.l.b16 %v816
  %v849 = vunpack.c.l.b16 %v817
  %v850 = vunpack.c.l.b16 %v818
  %v851 = vunpack.c.l.b16 %v819
  %v852 = vunpack.c.l.b16 %v820
  %v853 = vunpack.c.l.b16 %v821
  %v854 = vunpack.c.l.b16 %v822
  %v855 = vpack.c.b16 %v840, %v839
  %v856 = vpack.c.b16 %v842, %v841
  %v857 = vpack.c.b16 %v844, %v843
  %v858 = vpack.c.b16 %v846, %v845
  %v859 = vpack.c.b16 %v848, %v847
  %v860 = vpack.c.b16 %v850, %v849
  %v861 = vpack.c.b16 %v852, %v851
  %v862 = vpack.c.b16 %v854, %v853
  %871 = vmatprep.subr.bf16.mxu0 0
  %872 = vmatpush1.bf16.msra.mxu0 %v855
  %873 = vmatprep.subr.bf16.mxu0 0
  %874 = vmatpush1.bf16.msra.mxu0 %v856
  %875 = vmatprep.subr.bf16.mxu0 0
  %876 = vmatpush1.bf16.msra.mxu0 %v857
  %877 = vmatprep.subr.bf16.mxu0 0
  %878 = vmatpush1.bf16.msra.mxu0 %v858
  %879 = vmatprep.subr.bf16.mxu0 0
  %880 = vmatpush1.bf16.msra.mxu0 %v859
  %881 = vmatprep.subr.bf16.mxu0 0
  %882 = vmatpush1.bf16.msra.mxu0 %v860
  %883 = vmatprep.subr.bf16.mxu0 0
  %884 = vmatpush1.bf16.msra.mxu0 %v861
  %885 = vmatprep.subr.bf16.mxu0 0
  %886 = vmatpush1.bf16.msra.mxu0 %v862
  %887 = vmatprep.subr.bf16.mxu0 0
  %888 = vmatpush1.bf16.msra.mxu0 0
  %889 = vmatprep.subr.bf16.mxu0 0
  %890 = vmatpush1.bf16.msra.mxu0 0
  %891 = vmatprep.subr.bf16.mxu0 0
  %892 = vmatpush1.bf16.msra.mxu0 0
  %893 = vmatprep.subr.bf16.mxu0 0
  %894 = vmatpush1.bf16.msra.mxu0 0
  %895 = vmatprep.subr.bf16.mxu0 0
  %896 = vmatpush1.bf16.msra.mxu0 0
  %897 = vmatprep.subr.bf16.mxu0 0
  %898 = vmatpush1.bf16.msra.mxu0 0
  %899 = vmatprep.subr.bf16.mxu0 0
  %900 = vmatpush1.bf16.msra.mxu0 0
  %901 = vmatprep.subr.bf16.mxu0 0
  %902 = vmatpush1.bf16.msra.mxu0 0
  %903 = vmatprep.mubr.bf16.mxu0 0
  %904 = vmatmul.mubr.bf16.gmra.mrb[0].mxu0 %v791
  %v905 = vpop.f32.mrb[0].mxu0
  %v906 = vadd.f32 0.0, %v905
  %v907 = vpop.f32.mrb[0].mxu0
  %v908 = vpop.f32.mrb[0].mxu0
  %v909 = vadd.f32 0.0, %v908
  %v910 = vpop.f32.mrb[0].mxu0
  %911 = vmatprep.mubr.bf16.mxu0 0
  %912 = vmatmul.mubr.bf16.gmra.mrb[0].mxu0 %v792
  %v913 = vpop.f32.mrb[0].mxu0
  %v914 = vadd.f32 0.0, %v913
  %v915 = vpop.f32.mrb[0].mxu0
  %v916 = vpop.f32.mrb[0].mxu0
  %v917 = vadd.f32 0.0, %v916
  %v918 = vpop.f32.mrb[0].mxu0
  %919 = vmatprep.mubr.bf16.mxu0 0
  %920 = vmatmul.mubr.bf16.gmra.mrb[0].mxu0 %v793
  %v921 = vpop.f32.mrb[0].mxu0
  %v922 = vadd.f32 0.0, %v921
  %v923 = vpop.f32.mrb[0].mxu0
  %v924 = vpop.f32.mrb[0].mxu0
  %v925 = vadd.f32 0.0, %v924
  %v926 = vpop.f32.mrb[0].mxu0
  %927 = vmatprep.mubr.bf16.mxu0 0
  %928 = vmatmul.mubr.bf16.gmra.mrb[0].mxu0 %v794
  %v929 = vpop.f32.mrb[0].mxu0
  %v930 = vadd.f32 0.0, %v929
  %v931 = vpop.f32.mrb[0].mxu0
  %v932 = vpop.f32.mrb[0].mxu0
  %v933 = vadd.f32 0.0, %v932
  %v934 = vpop.f32.mrb[0].mxu0
  %935 = vmatprep.mubr.bf16.mxu0 0
  %936 = vmatmul.mubr.bf16.gmra.mrb[0].mxu0 %v795
  %v937 = vpop.f32.mrb[0].mxu0
  %v938 = vadd.f32 0.0, %v937
  %v939 = vpop.f32.mrb[0].mxu0
  %v940 = vpop.f32.mrb[0].mxu0
  %v941 = vadd.f32 0.0, %v940
  %v942 = vpop.f32.mrb[0].mxu0
  %943 = vmatprep.mubr.bf16.mxu0 0
  %944 = vmatmul.mubr.bf16.gmra.mrb[0].mxu0 %v796
  %v945 = vpop.f32.mrb[0].mxu0
  %v946 = vadd.f32 0.0, %v945
  %v947 = vpop.f32.mrb[0].mxu0
  %v948 = vpop.f32.mrb[0].mxu0
  %v949 = vadd.f32 0.0, %v948
  %v950 = vpop.f32.mrb[0].mxu0
  %951 = vmatprep.mubr.bf16.mxu0 0
  %952 = vmatmul.mubr.bf16.gmra.mrb[0].mxu0 %v797
  %v953 = vpop.f32.mrb[0].mxu0
  %v954 = vadd.f32 0.0, %v953
  %v955 = vpop.f32.mrb[0].mxu0
  %v956 = vpop.f32.mrb[0].mxu0
  %v957 = vadd.f32 0.0, %v956
  %v958 = vpop.f32.mrb[0].mxu0
  %959 = vmatprep.mubr.bf16.mxu0 0
  %960 = vmatmul.mubr.bf16.gmra.mrb[0].mxu0 %v798
  %v961 = vpop.f32.mrb[0].mxu0
  %v962 = vadd.f32 0.0, %v961
  %v963 = vpop.f32.mrb[0].mxu0
  %v964 = vpop.f32.mrb[0].mxu0
  %v965 = vadd.f32 0.0, %v964
  %v966 = vpop.f32.mrb[0].mxu0
  %967 = vmatprep.mubr.bf16.mxu0 0
  %968 = vmatmul.mubr.bf16.gmra.mrb[0].mxu0 %v799
  %v969 = vpop.f32.mrb[0].mxu0
  %v970 = vadd.f32 0.0, %v969
  %v971 = vpop.f32.mrb[0].mxu0
  %v972 = vpop.f32.mrb[0].mxu0
  %v973 = vadd.f32 0.0, %v972
  %v974 = vpop.f32.mrb[0].mxu0
  %975 = vmatprep.mubr.bf16.mxu0 0
  %976 = vmatmul.mubr.bf16.gmra.mrb[0].mxu0 %v800
  %v977 = vpop.f32.mrb[0].mxu0
  %v978 = vadd.f32 0.0, %v977
  %v979 = vpop.f32.mrb[0].mxu0
  %v980 = vpop.f32.mrb[0].mxu0
  %v981 = vadd.f32 0.0, %v980
  %v982 = vpop.f32.mrb[0].mxu0
  %983 = vmatprep.mubr.bf16.mxu0 0
  %984 = vmatmul.mubr.bf16.gmra.mrb[0].mxu0 %v801
  %v985 = vpop.f32.mrb[0].mxu0
  %v986 = vadd.f32 0.0, %v985
  %v987 = vpop.f32.mrb[0].mxu0
  %v988 = vpop.f32.mrb[0].mxu0
  %v989 = vadd.f32 0.0, %v988
  %v990 = vpop.f32.mrb[0].mxu0
  %991 = vmatprep.mubr.bf16.mxu0 0
  %992 = vmatmul.mubr.bf16.gmra.mrb[0].mxu0 %v802
  %v993 = vpop.f32.mrb[0].mxu0
  %v994 = vadd.f32 0.0, %v993
  %v995 = vpop.f32.mrb[0].mxu0
  %v996 = vpop.f32.mrb[0].mxu0
  %v997 = vadd.f32 0.0, %v996
  %v998 = vpop.f32.mrb[0].mxu0
  %999 = vmatprep.mubr.bf16.mxu0 0
  %1000 = vmatmul.mubr.bf16.gmra.mrb[0].mxu0 %v803
  %v1001 = vpop.f32.mrb[0].mxu0
  %v1002 = vadd.f32 0.0, %v1001
  %v1003 = vpop.f32.mrb[0].mxu0
  %v1004 = vpop.f32.mrb[0].mxu0
  %v1005 = vadd.f32 0.0, %v1004
  %v1006 = vpop.f32.mrb[0].mxu0
  %1007 = vmatprep.mubr.bf16.mxu0 0
  %1008 = vmatmul.mubr.bf16.gmra.mrb[0].mxu0 %v804
  %v1009 = vpop.f32.mrb[0].mxu0
  %v1010 = vadd.f32 0.0, %v1009
  %v1011 = vpop.f32.mrb[0].mxu0
  %v1012 = vpop.f32.mrb[0].mxu0
  %v1013 = vadd.f32 0.0, %v1012
  %v1014 = vpop.f32.mrb[0].mxu0
  %1015 = vmatprep.mubr.bf16.mxu0 0
  %1016 = vmatmul.mubr.bf16.gmra.mrb[0].mxu0 %v805
  %v1017 = vpop.f32.mrb[0].mxu0
  %v1018 = vadd.f32 0.0, %v1017
  %v1019 = vpop.f32.mrb[0].mxu0
  %v1020 = vpop.f32.mrb[0].mxu0
  %v1021 = vadd.f32 0.0, %v1020
  %v1022 = vpop.f32.mrb[0].mxu0
  %1023 = vmatprep.mubr.bf16.mxu0 0
  %1024 = vmatmul.mubr.bf16.gmra.mrb[0].mxu0 %v806
  %v1025 = vpop.f32.mrb[0].mxu0
  %v1026 = vadd.f32 0.0, %v1025
  %v1027 = vpop.f32.mrb[0].mxu0
  %v1028 = vpop.f32.mrb[0].mxu0
  %v1029 = vadd.f32 0.0, %v1028
  %v1030 = vpop.f32.mrb[0].mxu0
  %1031 = vdwg.mxu0
  %v1032 = vpack.c.bf16 %v909, %v906
  %v1033 = vpack.c.bf16 %v917, %v914
  %v1034 = vpack.c.bf16 %v925, %v922
  %v1035 = vpack.c.bf16 %v933, %v930
  %v1036 = vpack.c.bf16 %v941, %v938
  %v1037 = vpack.c.bf16 %v949, %v946
  %v1038 = vpack.c.bf16 %v957, %v954
  %v1039 = vpack.c.bf16 %v965, %v962
  %v1040 = vpack.c.bf16 %v973, %v970
  %v1041 = vpack.c.bf16 %v981, %v978
  %v1042 = vpack.c.bf16 %v989, %v986
  %v1043 = vpack.c.bf16 %v997, %v994
  %v1044 = vpack.c.bf16 %v1005, %v1002
  %v1045 = vpack.c.bf16 %v1013, %v1010
  %v1046 = vpack.c.bf16 %v1021, %v1018
  %v1047 = vpack.c.bf16 %v1029, %v1026
  %v1048 = vld [vmem:[%s5] sm:$0x1]
  %v1050 = vlaneseq
  %v1051 = vshrl.u32 %v1050, 7
  %v1052 = vsub.s32 0, %v1051
  %v1053 = vrot.slane %v1048, %v1052
  %1055 = vmatprep.subr.bf16.mxu0 0
  %1056 = vmatpush1.bf16.msra.mxu0 %v1032
  %1057 = vmatprep.subr.bf16.mxu0 0
  %1058 = vmatpush1.bf16.msra.mxu0 %v1033
  %1059 = vmatprep.subr.bf16.mxu0 0
  %1060 = vmatpush1.bf16.msra.mxu0 %v1034
  %1061 = vmatprep.subr.bf16.mxu0 0
  %1062 = vmatpush1.bf16.msra.mxu0 %v1035
  %1063 = vmatprep.subr.bf16.mxu0 0
  %1064 = vmatpush1.bf16.msra.mxu0 %v1036
  %1065 = vmatprep.subr.bf16.mxu0 0
  %1066 = vmatpush1.bf16.msra.mxu0 %v1037
  %1067 = vmatprep.subr.bf16.mxu0 0
  %1068 = vmatpush1.bf16.msra.mxu0 %v1038
  %1069 = vmatprep.subr.bf16.mxu0 0
  %1070 = vmatpush1.bf16.msra.mxu0 %v1039
  %1071 = vmatprep.subr.bf16.mxu0 0
  %1072 = vmatpush1.bf16.msra.mxu0 %v1040
  %1073 = vmatprep.subr.bf16.mxu0 0
  %1074 = vmatpush1.bf16.msra.mxu0 %v1041
  %1075 = vmatprep.subr.bf16.mxu0 0
  %1076 = vmatpush1.bf16.msra.mxu0 %v1042
  %1077 = vmatprep.subr.bf16.mxu0 0
  %1078 = vmatpush1.bf16.msra.mxu0 %v1043
  %1079 = vmatprep.subr.bf16.mxu0 0
  %1080 = vmatpush1.bf16.msra.mxu0 %v1044
  %1081 = vmatprep.subr.bf16.mxu0 0
  %1082 = vmatpush1.bf16.msra.mxu0 %v1045
  %1083 = vmatprep.subr.bf16.mxu0 0
  %1084 = vmatpush1.bf16.msra.mxu0 %v1046
  %1085 = vmatprep.subr.bf16.mxu0 0
  %1086 = vmatpush1.bf16.msra.mxu0 %v1047
  %1087 = vmatprep.mubr.bf16.mxu0 %v535
  %1088 = vmatmul.mubr.bf16.gmra.mrb[0].mxu0 %v534
  %v1089 = vpop.f32.mrb[0].mxu0
  %v1090 = vadd.f32 %v1053, %v1089
  %v1091 = vpop.f32.mrb[0].mxu0
  %v1092 = vpop.f32.mrb[0].mxu0
  %v1093 = vadd.f32 %v1053, %v1092
  %v1094 = vpop.f32.mrb[0].mxu0
  %1095 = vmatprep.mubr.bf16.mxu0 %v537
  %1096 = vmatmul.mubr.bf16.gmra.mrb[0].mxu0 %v536
  %v1097 = vpop.f32.mrb[0].mxu0
  %v1098 = vadd.f32 %v1053, %v1097
  %v1099 = vpop.f32.mrb[0].mxu0
  %v1100 = vpop.f32.mrb[0].mxu0
  %v1101 = vadd.f32 %v1053, %v1100
  %v1102 = vpop.f32.mrb[0].mxu0
  %1103 = vmatprep.mubr.bf16.mxu0 %v539
  %1104 = vmatmul.mubr.bf16.gmra.mrb[0].mxu0 %v538
  %v1105 = vpop.f32.mrb[0].mxu0
  %v1106 = vadd.f32 %v1053, %v1105
  %v1107 = vpop.f32.mrb[0].mxu0
  %v1108 = vpop.f32.mrb[0].mxu0
  %v1109 = vadd.f32 %v1053, %v1108
  %v1110 = vpop.f32.mrb[0].mxu0
  %1111 = vmatprep.mubr.bf16.mxu0 %v541
  %1112 = vmatmul.mubr.bf16.gmra.mrb[0].mxu0 %v540
  %v1113 = vpop.f32.mrb[0].mxu0
  %v1114 = vadd.f32 %v1053, %v1113
  %v1115 = vpop.f32.mrb[0].mxu0
  %v1116 = vpop.f32.mrb[0].mxu0
  %v1117 = vadd.f32 %v1053, %v1116
  %v1118 = vpop.f32.mrb[0].mxu0
  %1119 = vmatprep.mubr.bf16.mxu0 %v543
  %1120 = vmatmul.mubr.bf16.gmra.mrb[0].mxu0 %v542
  %v1121 = vpop.f32.mrb[0].mxu0
  %v1122 = vadd.f32 %v1053, %v1121
  %v1123 = vpop.f32.mrb[0].mxu0
  %v1124 = vpop.f32.mrb[0].mxu0
  %v1125 = vadd.f32 %v1053, %v1124
  %v1126 = vpop.f32.mrb[0].mxu0
  %1127 = vmatprep.mubr.bf16.mxu0 %v545
  %1128 = vmatmul.mubr.bf16.gmra.mrb[0].mxu0 %v544
  %v1129 = vpop.f32.mrb[0].mxu0
  %v1130 = vadd.f32 %v1053, %v1129
  %v1131 = vpop.f32.mrb[0].mxu0
  %v1132 = vpop.f32.mrb[0].mxu0
  %v1133 = vadd.f32 %v1053, %v1132
  %v1134 = vpop.f32.mrb[0].mxu0
  %1135 = vmatprep.mubr.bf16.mxu0 %v547
  %1136 = vmatmul.mubr.bf16.gmra.mrb[0].mxu0 %v546
  %v1137 = vpop.f32.mrb[0].mxu0
  %v1138 = vadd.f32 %v1053, %v1137
  %v1139 = vpop.f32.mrb[0].mxu0
  %v1140 = vpop.f32.mrb[0].mxu0
  %v1141 = vadd.f32 %v1053, %v1140
  %v1142 = vpop.f32.mrb[0].mxu0
  %1143 = vmatprep.mubr.bf16.mxu0 %v549
  %1144 = vmatmul.mubr.bf16.gmra.mrb[0].mxu0 %v548
  %v1145 = vpop.f32.mrb[0].mxu0
  %v1146 = vadd.f32 %v1053, %v1145
  %v1147 = vpop.f32.mrb[0].mxu0
  %v1148 = vpop.f32.mrb[0].mxu0
  %v1149 = vadd.f32 %v1053, %v1148
  %v1150 = vpop.f32.mrb[0].mxu0
  %1151 = vmatprep.mubr.bf16.mxu0 %v551
  %1152 = vmatmul.mubr.bf16.gmra.mrb[0].mxu0 %v550
  %v1153 = vpop.f32.mrb[0].mxu0
  %v1154 = vadd.f32 %v1053, %v1153
  %v1155 = vpop.f32.mrb[0].mxu0
  %v1156 = vpop.f32.mrb[0].mxu0
  %v1157 = vadd.f32 %v1053, %v1156
  %v1158 = vpop.f32.mrb[0].mxu0
  %1159 = vmatprep.mubr.bf16.mxu0 %v553
  %1160 = vmatmul.mubr.bf16.gmra.mrb[0].mxu0 %v552
  %v1161 = vpop.f32.mrb[0].mxu0
  %v1162 = vadd.f32 %v1053, %v1161
  %v1163 = vpop.f32.mrb[0].mxu0
  %v1164 = vpop.f32.mrb[0].mxu0
  %v1165 = vadd.f32 %v1053, %v1164
  %v1166 = vpop.f32.mrb[0].mxu0
  %1167 = vmatprep.mubr.bf16.mxu0 %v555
  %1168 = vmatmul.mubr.bf16.gmra.mrb[0].mxu0 %v554
  %v1169 = vpop.f32.mrb[0].mxu0
  %v1170 = vadd.f32 %v1053, %v1169
  %v1171 = vpop.f32.mrb[0].mxu0
  %v1172 = vpop.f32.mrb[0].mxu0
  %v1173 = vadd.f32 %v1053, %v1172
  %v1174 = vpop.f32.mrb[0].mxu0
  %1175 = vmatprep.mubr.bf16.mxu0 %v557
  %1176 = vmatmul.mubr.bf16.gmra.mrb[0].mxu0 %v556
  %v1177 = vpop.f32.mrb[0].mxu0
  %v1178 = vadd.f32 %v1053, %v1177
  %v1179 = vpop.f32.mrb[0].mxu0
  %v1180 = vpop.f32.mrb[0].mxu0
  %v1181 = vadd.f32 %v1053, %v1180
  %v1182 = vpop.f32.mrb[0].mxu0
  %1183 = vmatprep.mubr.bf16.mxu0 %v559
  %1184 = vmatmul.mubr.bf16.gmra.mrb[0].mxu0 %v558
  %v1185 = vpop.f32.mrb[0].mxu0
  %v1186 = vadd.f32 %v1053, %v1185
  %v1187 = vpop.f32.mrb[0].mxu0
  %v1188 = vpop.f32.mrb[0].mxu0
  %v1189 = vadd.f32 %v1053, %v1188
  %v1190 = vpop.f32.mrb[0].mxu0
  %1191 = vmatprep.mubr.bf16.mxu0 %v561
  %1192 = vmatmul.mubr.bf16.gmra.mrb[0].mxu0 %v560
  %v1193 = vpop.f32.mrb[0].mxu0
  %v1194 = vadd.f32 %v1053, %v1193
  %v1195 = vpop.f32.mrb[0].mxu0
  %v1196 = vpop.f32.mrb[0].mxu0
  %v1197 = vadd.f32 %v1053, %v1196
  %v1198 = vpop.f32.mrb[0].mxu0
  %1199 = vmatprep.mubr.bf16.mxu0 %v563
  %1200 = vmatmul.mubr.bf16.gmra.mrb[0].mxu0 %v562
  %v1201 = vpop.f32.mrb[0].mxu0
  %v1202 = vadd.f32 %v1053, %v1201
  %v1203 = vpop.f32.mrb[0].mxu0
  %v1204 = vpop.f32.mrb[0].mxu0
  %v1205 = vadd.f32 %v1053, %v1204
  %v1206 = vpop.f32.mrb[0].mxu0
  %1207 = vmatprep.mubr.bf16.mxu0 %v565
  %1208 = vmatmul.mubr.bf16.gmra.mrb[0].mxu0 %v564
  %v1209 = vpop.f32.mrb[0].mxu0
  %v1210 = vadd.f32 %v1053, %v1209
  %v1211 = vpop.f32.mrb[0].mxu0
  %v1212 = vpop.f32.mrb[0].mxu0
  %v1213 = vadd.f32 %v1053, %v1212
  %v1214 = vpop.f32.mrb[0].mxu0
  %1215 = vdwg.mxu0
  %v1216 = vmax.f32 %v1090, 0.0
  %v1217 = vmax.f32 %v1093, 0.0
  %v1218 = vmax.f32 %v1098, 0.0
  %v1219 = vmax.f32 %v1101, 0.0
  %v1220 = vmax.f32 %v1106, 0.0
  %v1221 = vmax.f32 %v1109, 0.0
  %v1222 = vmax.f32 %v1114, 0.0
  %v1223 = vmax.f32 %v1117, 0.0
  %v1224 = vmax.f32 %v1122, 0.0
  %v1225 = vmax.f32 %v1125, 0.0
  %v1226 = vmax.f32 %v1130, 0.0
  %v1227 = vmax.f32 %v1133, 0.0
  %v1228 = vmax.f32 %v1138, 0.0
  %v1229 = vmax.f32 %v1141, 0.0
  %v1230 = vmax.f32 %v1146, 0.0
  %v1231 = vmax.f32 %v1149, 0.0
  %v1232 = vmax.f32 %v1154, 0.0
  %v1233 = vmax.f32 %v1157, 0.0
  %v1234 = vmax.f32 %v1162, 0.0
  %v1235 = vmax.f32 %v1165, 0.0
  %v1236 = vmax.f32 %v1170, 0.0
  %v1237 = vmax.f32 %v1173, 0.0
  %v1238 = vmax.f32 %v1178, 0.0
  %v1239 = vmax.f32 %v1181, 0.0
  %v1240 = vmax.f32 %v1186, 0.0
  %v1241 = vmax.f32 %v1189, 0.0
  %v1242 = vmax.f32 %v1194, 0.0
  %v1243 = vmax.f32 %v1197, 0.0
  %v1244 = vmax.f32 %v1202, 0.0
  %v1245 = vmax.f32 %v1205, 0.0
  %v1246 = vmax.f32 %v1210, 0.0
  %v1247 = vmax.f32 %v1213, 0.0
  %v1248 = vpack.c.bf16 %v1217, %v1216
  %v1249 = vpack.c.bf16 %v1219, %v1218
  %v1250 = vpack.c.bf16 %v1221, %v1220
  %v1251 = vpack.c.bf16 %v1223, %v1222
  %v1252 = vpack.c.bf16 %v1225, %v1224
  %v1253 = vpack.c.bf16 %v1227, %v1226
  %v1254 = vpack.c.bf16 %v1229, %v1228
  %v1255 = vpack.c.bf16 %v1231, %v1230
  %v1256 = vpack.c.bf16 %v1233, %v1232
  %v1257 = vpack.c.bf16 %v1235, %v1234
  %v1258 = vpack.c.bf16 %v1237, %v1236
  %v1259 = vpack.c.bf16 %v1239, %v1238
  %v1260 = vpack.c.bf16 %v1241, %v1240
  %v1261 = vpack.c.bf16 %v1243, %v1242
  %v1262 = vpack.c.bf16 %v1245, %v1244
  %v1263 = vpack.c.bf16 %v1247, %v1246
  %v1264 = vld [vmem:[%s6] sm:$0xf]
  %v1265 = vld [vmem:[%s6 + $0x4] sm:$0xf]
  %v1266 = vld [vmem:[%s6 + $0x8] sm:$0xf]
  %v1267 = vld [vmem:[%s6 + $0xc] sm:$0xf]
  %v1268 = vld [vmem:[%s6 + $0x10] sm:$0xf]
  %v1269 = vld [vmem:[%s6 + $0x14] sm:$0xf]
  %v1270 = vld [vmem:[%s6 + $0x18] sm:$0xf]
  %v1271 = vld [vmem:[%s6 + $0x1c] sm:$0xf]
  %v1272 = vld [vmem:[%s6 + $0x20] sm:$0xf]
  %v1273 = vld [vmem:[%s6 + $0x24] sm:$0xf]
  %v1274 = vld [vmem:[%s6 + $0x28] sm:$0xf]
  %v1275 = vld [vmem:[%s6 + $0x2c] sm:$0xf]
  %v1276 = vld [vmem:[%s6 + $0x30] sm:$0xf]
  %v1277 = vld [vmem:[%s6 + $0x34] sm:$0xf]
  %v1278 = vld [vmem:[%s6 + $0x38] sm:$0xf]
  %v1279 = vld [vmem:[%s6 + $0x3c] sm:$0xf]
  %v1280 = vld [vmem:[%s7] sm:$0x1]
  %v1282 = vlaneseq
  %v1283 = vshrl.u32 %v1282, 7
  %v1284 = vsub.s32 0, %v1283
  %v1285 = vrot.slane %v1280, %v1284
  %v1303 = vunpack.c.l.b16 %v1264
  %v1304 = vunpack.c.l.b16 %v1265
  %v1305 = vunpack.c.l.b16 %v1266
  %v1306 = vunpack.c.l.b16 %v1267
  %v1307 = vunpack.c.l.b16 %v1268
  %v1308 = vunpack.c.l.b16 %v1269
  %v1309 = vunpack.c.l.b16 %v1270
  %v1310 = vunpack.c.l.b16 %v1271
  %v1311 = vunpack.c.l.b16 %v1272
  %v1312 = vunpack.c.l.b16 %v1273
  %v1313 = vunpack.c.l.b16 %v1274
  %v1314 = vunpack.c.l.b16 %v1275
  %v1315 = vunpack.c.l.b16 %v1276
  %v1316 = vunpack.c.l.b16 %v1277
  %v1317 = vunpack.c.l.b16 %v1278
  %v1318 = vunpack.c.l.b16 %v1279
  %v1319 = vpack.c.b16 %v1304, %v1303
  %v1320 = vpack.c.b16 %v1306, %v1305
  %v1321 = vpack.c.b16 %v1308, %v1307
  %v1322 = vpack.c.b16 %v1310, %v1309
  %v1323 = vpack.c.b16 %v1312, %v1311
  %v1324 = vpack.c.b16 %v1314, %v1313
  %v1325 = vpack.c.b16 %v1316, %v1315
  %v1326 = vpack.c.b16 %v1318, %v1317
  %1335 = vmatprep.subr.bf16.mxu0 0
  %1336 = vmatpush1.bf16.msra.mxu0 %v1319
  %1337 = vmatprep.subr.bf16.mxu0 0
  %1338 = vmatpush1.bf16.msra.mxu0 %v1320
  %1339 = vmatprep.subr.bf16.mxu0 0
  %1340 = vmatpush1.bf16.msra.mxu0 %v1321
  %1341 = vmatprep.subr.bf16.mxu0 0
  %1342 = vmatpush1.bf16.msra.mxu0 %v1322
  %1343 = vmatprep.subr.bf16.mxu0 0
  %1344 = vmatpush1.bf16.msra.mxu0 %v1323
  %1345 = vmatprep.subr.bf16.mxu0 0
  %1346 = vmatpush1.bf16.msra.mxu0 %v1324
  %1347 = vmatprep.subr.bf16.mxu0 0
  %1348 = vmatpush1.bf16.msra.mxu0 %v1325
  %1349 = vmatprep.subr.bf16.mxu0 0
  %1350 = vmatpush1.bf16.msra.mxu0 %v1326
  %1351 = vmatprep.subr.bf16.mxu0 0
  %1352 = vmatpush1.bf16.msra.mxu0 0
  %1353 = vmatprep.subr.bf16.mxu0 0
  %1354 = vmatpush1.bf16.msra.mxu0 0
  %1355 = vmatprep.subr.bf16.mxu0 0
  %1356 = vmatpush1.bf16.msra.mxu0 0
  %1357 = vmatprep.subr.bf16.mxu0 0
  %1358 = vmatpush1.bf16.msra.mxu0 0
  %1359 = vmatprep.subr.bf16.mxu0 0
  %1360 = vmatpush1.bf16.msra.mxu0 0
  %1361 = vmatprep.subr.bf16.mxu0 0
  %1362 = vmatpush1.bf16.msra.mxu0 0
  %1363 = vmatprep.subr.bf16.mxu0 0
  %1364 = vmatpush1.bf16.msra.mxu0 0
  %1365 = vmatprep.subr.bf16.mxu0 0
  %1366 = vmatpush1.bf16.msra.mxu0 0
  %1367 = vmatprep.mubr.bf16.mxu0 0
  %1368 = vmatmul.mubr.bf16.gmra.mrb[0].mxu0 %v1248
  %v1369 = vpop.f32.mrb[0].mxu0
  %v1370 = vadd.f32 %v1285, %v1369
  %v1371 = vpop.f32.mrb[0].mxu0
  %v1372 = vpop.f32.mrb[0].mxu0
  %v1373 = vadd.f32 %v1285, %v1372
  %v1374 = vpop.f32.mrb[0].mxu0
  %1375 = vmatprep.mubr.bf16.mxu0 0
  %1376 = vmatmul.mubr.bf16.gmra.mrb[0].mxu0 %v1249
  %v1377 = vpop.f32.mrb[0].mxu0
  %v1378 = vadd.f32 %v1285, %v1377
  %v1379 = vpop.f32.mrb[0].mxu0
  %v1380 = vpop.f32.mrb[0].mxu0
  %v1381 = vadd.f32 %v1285, %v1380
  %v1382 = vpop.f32.mrb[0].mxu0
  %1383 = vmatprep.mubr.bf16.mxu0 0
  %1384 = vmatmul.mubr.bf16.gmra.mrb[0].mxu0 %v1250
  %v1385 = vpop.f32.mrb[0].mxu0
  %v1386 = vadd.f32 %v1285, %v1385
  %v1387 = vpop.f32.mrb[0].mxu0
  %v1388 = vpop.f32.mrb[0].mxu0
  %v1389 = vadd.f32 %v1285, %v1388
  %v1390 = vpop.f32.mrb[0].mxu0
  %1391 = vmatprep.mubr.bf16.mxu0 0
  %1392 = vmatmul.mubr.bf16.gmra.mrb[0].mxu0 %v1251
  %v1393 = vpop.f32.mrb[0].mxu0
  %v1394 = vadd.f32 %v1285, %v1393
  %v1395 = vpop.f32.mrb[0].mxu0
  %v1396 = vpop.f32.mrb[0].mxu0
  %v1397 = vadd.f32 %v1285, %v1396
  %v1398 = vpop.f32.mrb[0].mxu0
  %1399 = vmatprep.mubr.bf16.mxu0 0
  %1400 = vmatmul.mubr.bf16.gmra.mrb[0].mxu0 %v1252
  %v1401 = vpop.f32.mrb[0].mxu0
  %v1402 = vadd.f32 %v1285, %v1401
  %v1403 = vpop.f32.mrb[0].mxu0
  %v1404 = vpop.f32.mrb[0].mxu0
  %v1405 = vadd.f32 %v1285, %v1404
  %v1406 = vpop.f32.mrb[0].mxu0
  %1407 = vmatprep.mubr.bf16.mxu0 0
  %1408 = vmatmul.mubr.bf16.gmra.mrb[0].mxu0 %v1253
  %v1409 = vpop.f32.mrb[0].mxu0
  %v1410 = vadd.f32 %v1285, %v1409
  %v1411 = vpop.f32.mrb[0].mxu0
  %v1412 = vpop.f32.mrb[0].mxu0
  %v1413 = vadd.f32 %v1285, %v1412
  %v1414 = vpop.f32.mrb[0].mxu0
  %1415 = vmatprep.mubr.bf16.mxu0 0
  %1416 = vmatmul.mubr.bf16.gmra.mrb[0].mxu0 %v1254
  %v1417 = vpop.f32.mrb[0].mxu0
  %v1418 = vadd.f32 %v1285, %v1417
  %v1419 = vpop.f32.mrb[0].mxu0
  %v1420 = vpop.f32.mrb[0].mxu0
  %v1421 = vadd.f32 %v1285, %v1420
  %v1422 = vpop.f32.mrb[0].mxu0
  %1423 = vmatprep.mubr.bf16.mxu0 0
  %1424 = vmatmul.mubr.bf16.gmra.mrb[0].mxu0 %v1255
  %v1425 = vpop.f32.mrb[0].mxu0
  %v1426 = vadd.f32 %v1285, %v1425
  %v1427 = vpop.f32.mrb[0].mxu0
  %v1428 = vpop.f32.mrb[0].mxu0
  %v1429 = vadd.f32 %v1285, %v1428
  %v1430 = vpop.f32.mrb[0].mxu0
  %1431 = vmatprep.mubr.bf16.mxu0 0
  %1432 = vmatmul.mubr.bf16.gmra.mrb[0].mxu0 %v1256
  %v1433 = vpop.f32.mrb[0].mxu0
  %v1434 = vadd.f32 %v1285, %v1433
  %v1435 = vpop.f32.mrb[0].mxu0
  %v1436 = vpop.f32.mrb[0].mxu0
  %v1437 = vadd.f32 %v1285, %v1436
  %v1438 = vpop.f32.mrb[0].mxu0
  %1439 = vmatprep.mubr.bf16.mxu0 0
  %1440 = vmatmul.mubr.bf16.gmra.mrb[0].mxu0 %v1257
  %v1441 = vpop.f32.mrb[0].mxu0
  %v1442 = vadd.f32 %v1285, %v1441
  %v1443 = vpop.f32.mrb[0].mxu0
  %v1444 = vpop.f32.mrb[0].mxu0
  %v1445 = vadd.f32 %v1285, %v1444
  %v1446 = vpop.f32.mrb[0].mxu0
  %1447 = vmatprep.mubr.bf16.mxu0 0
  %1448 = vmatmul.mubr.bf16.gmra.mrb[0].mxu0 %v1258
  %v1449 = vpop.f32.mrb[0].mxu0
  %v1450 = vadd.f32 %v1285, %v1449
  %v1451 = vpop.f32.mrb[0].mxu0
  %v1452 = vpop.f32.mrb[0].mxu0
  %v1453 = vadd.f32 %v1285, %v1452
  %v1454 = vpop.f32.mrb[0].mxu0
  %1455 = vmatprep.mubr.bf16.mxu0 0
  %1456 = vmatmul.mubr.bf16.gmra.mrb[0].mxu0 %v1259
  %v1457 = vpop.f32.mrb[0].mxu0
  %v1458 = vadd.f32 %v1285, %v1457
  %v1459 = vpop.f32.mrb[0].mxu0
  %v1460 = vpop.f32.mrb[0].mxu0
  %v1461 = vadd.f32 %v1285, %v1460
  %v1462 = vpop.f32.mrb[0].mxu0
  %1463 = vmatprep.mubr.bf16.mxu0 0
  %1464 = vmatmul.mubr.bf16.gmra.mrb[0].mxu0 %v1260
  %v1465 = vpop.f32.mrb[0].mxu0
  %v1466 = vadd.f32 %v1285, %v1465
  %v1467 = vpop.f32.mrb[0].mxu0
  %v1468 = vpop.f32.mrb[0].mxu0
  %v1469 = vadd.f32 %v1285, %v1468
  %v1470 = vpop.f32.mrb[0].mxu0
  %1471 = vmatprep.mubr.bf16.mxu0 0
  %1472 = vmatmul.mubr.bf16.gmra.mrb[0].mxu0 %v1261
  %v1473 = vpop.f32.mrb[0].mxu0
  %v1474 = vadd.f32 %v1285, %v1473
  %v1475 = vpop.f32.mrb[0].mxu0
  %v1476 = vpop.f32.mrb[0].mxu0
  %v1477 = vadd.f32 %v1285, %v1476
  %v1478 = vpop.f32.mrb[0].mxu0
  %1479 = vmatprep.mubr.bf16.mxu0 0
  %1480 = vmatmul.mubr.bf16.gmra.mrb[0].mxu0 %v1262
  %v1481 = vpop.f32.mrb[0].mxu0
  %v1482 = vadd.f32 %v1285, %v1481
  %v1483 = vpop.f32.mrb[0].mxu0
  %v1484 = vpop.f32.mrb[0].mxu0
  %v1485 = vadd.f32 %v1285, %v1484
  %v1486 = vpop.f32.mrb[0].mxu0
  %1487 = vmatprep.mubr.bf16.mxu0 0
  %1488 = vmatmul.mubr.bf16.gmra.mrb[0].mxu0 %v1263
  %v1489 = vpop.f32.mrb[0].mxu0
  %v1490 = vadd.f32 %v1285, %v1489
  %v1491 = vpop.f32.mrb[0].mxu0
  %v1492 = vpop.f32.mrb[0].mxu0
  %v1493 = vadd.f32 %v1285, %v1492
  %v1494 = vpop.f32.mrb[0].mxu0
  %1495 = vdwg.mxu0
  %v1496 = vpack.c.bf16 %v1373, %v1370
  %v1497 = vpack.c.bf16 %v1381, %v1378
  %v1498 = vpack.c.bf16 %v1389, %v1386
  %v1499 = vpack.c.bf16 %v1397, %v1394
  %v1500 = vpack.c.bf16 %v1405, %v1402
  %v1501 = vpack.c.bf16 %v1413, %v1410
  %v1502 = vpack.c.bf16 %v1421, %v1418
  %v1503 = vpack.c.bf16 %v1429, %v1426
  %v1504 = vpack.c.bf16 %v1437, %v1434
  %v1505 = vpack.c.bf16 %v1445, %v1442
  %v1506 = vpack.c.bf16 %v1453, %v1450
  %v1507 = vpack.c.bf16 %v1461, %v1458
  %v1508 = vpack.c.bf16 %v1469, %v1466
  %v1509 = vpack.c.bf16 %v1477, %v1474
  %v1510 = vpack.c.bf16 %v1485, %v1482
  %v1511 = vpack.c.bf16 %v1493, %v1490
  %v1528 = vunpack.c.l.b16 %v1496
  %v1529 = vunpack.c.h.b16 %v1496
  %v1530 = vunpack.c.l.b16 %v1497
  %v1531 = vunpack.c.h.b16 %v1497
  %v1532 = vunpack.c.l.b16 %v1498
  %v1533 = vunpack.c.h.b16 %v1498
  %v1534 = vunpack.c.l.b16 %v1499
  %v1535 = vunpack.c.h.b16 %v1499
  %v1536 = vunpack.c.l.b16 %v1500
  %v1537 = vunpack.c.h.b16 %v1500
  %v1538 = vunpack.c.l.b16 %v1501
  %v1539 = vunpack.c.h.b16 %v1501
  %v1540 = vunpack.c.l.b16 %v1502
  %v1541 = vunpack.c.h.b16 %v1502
  %v1542 = vunpack.c.l.b16 %v1503
  %v1543 = vunpack.c.h.b16 %v1503
  %v1544 = vunpack.c.l.b16 %v1504
  %v1545 = vunpack.c.h.b16 %v1504
  %v1546 = vunpack.c.l.b16 %v1505
  %v1547 = vunpack.c.h.b16 %v1505
  %v1548 = vunpack.c.l.b16 %v1506
  %v1549 = vunpack.c.h.b16 %v1506
  %v1550 = vunpack.c.l.b16 %v1507
  %v1551 = vunpack.c.h.b16 %v1507
  %v1552 = vunpack.c.l.b16 %v1508
  %v1553 = vunpack.c.h.b16 %v1508
  %v1554 = vunpack.c.l.b16 %v1509
  %v1555 = vunpack.c.h.b16 %v1509
  %v1556 = vunpack.c.l.b16 %v1510
  %v1557 = vunpack.c.h.b16 %v1510
  %v1558 = vunpack.c.l.b16 %v1511
  %v1559 = vunpack.c.h.b16 %v1511
  %v1560 = vpack.c.b16 %v1528, %v1528
  %v1561 = vpack.c.b16 %v1529, %v1529
  %v1562 = vpack.c.b16 %v1530, %v1530
  %v1563 = vpack.c.b16 %v1531, %v1531
  %v1564 = vpack.c.b16 %v1532, %v1532
  %v1565 = vpack.c.b16 %v1533, %v1533
  %v1566 = vpack.c.b16 %v1534, %v1534
  %v1567 = vpack.c.b16 %v1535, %v1535
  %v1568 = vpack.c.b16 %v1536, %v1536
  %v1569 = vpack.c.b16 %v1537, %v1537
  %v1570 = vpack.c.b16 %v1538, %v1538
  %v1571 = vpack.c.b16 %v1539, %v1539
  %v1572 = vpack.c.b16 %v1540, %v1540
  %v1573 = vpack.c.b16 %v1541, %v1541
  %v1574 = vpack.c.b16 %v1542, %v1542
  %v1575 = vpack.c.b16 %v1543, %v1543
  %v1576 = vpack.c.b16 %v1544, %v1544
  %v1577 = vpack.c.b16 %v1545, %v1545
  %v1578 = vpack.c.b16 %v1546, %v1546
  %v1579 = vpack.c.b16 %v1547, %v1547
  %v1580 = vpack.c.b16 %v1548, %v1548
  %v1581 = vpack.c.b16 %v1549, %v1549
  %v1582 = vpack.c.b16 %v1550, %v1550
  %v1583 = vpack.c.b16 %v1551, %v1551
  %v1584 = vpack.c.b16 %v1552, %v1552
  %v1585 = vpack.c.b16 %v1553, %v1553
  %v1586 = vpack.c.b16 %v1554, %v1554
  %v1587 = vpack.c.b16 %v1555, %v1555
  %v1588 = vpack.c.b16 %v1556, %v1556
  %v1589 = vpack.c.b16 %v1557, %v1557
  %v1590 = vpack.c.b16 %v1558, %v1558
  %v1591 = vpack.c.b16 %v1559, %v1559
  %1624 = vst [vmem:[%s8] sm:$0xf] %v1560
  %1625 = vst [vmem:[%s8 + $0x4] sm:$0xf] %v1561
  %1626 = vst [vmem:[%s8 + $0x8] sm:$0xf] %v1562
  %1627 = vst [vmem:[%s8 + $0xc] sm:$0xf] %v1563
  %1628 = vst [vmem:[%s8 + $0x10] sm:$0xf] %v1564
  %1629 = vst [vmem:[%s8 + $0x14] sm:$0xf] %v1565
  %1630 = vst [vmem:[%s8 + $0x18] sm:$0xf] %v1566
  %1631 = vst [vmem:[%s8 + $0x1c] sm:$0xf] %v1567
  %1632 = vst [vmem:[%s8 + $0x20] sm:$0xf] %v1568
  %1633 = vst [vmem:[%s8 + $0x24] sm:$0xf] %v1569
  %1634 = vst [vmem:[%s8 + $0x28] sm:$0xf] %v1570
  %1635 = vst [vmem:[%s8 + $0x2c] sm:$0xf] %v1571
  %1636 = vst [vmem:[%s8 + $0x30] sm:$0xf] %v1572
  %1637 = vst [vmem:[%s8 + $0x34] sm:$0xf] %v1573
  %1638 = vst [vmem:[%s8 + $0x38] sm:$0xf] %v1574
  %1639 = vst [vmem:[%s8 + $0x3c] sm:$0xf] %v1575
  %1640 = vst [vmem:[%s8 + $0x40] sm:$0xf] %v1576
  %1641 = vst [vmem:[%s8 + $0x44] sm:$0xf] %v1577
  %1642 = vst [vmem:[%s8 + $0x48] sm:$0xf] %v1578
  %1643 = vst [vmem:[%s8 + $0x4c] sm:$0xf] %v1579
  %1644 = vst [vmem:[%s8 + $0x50] sm:$0xf] %v1580
  %1645 = vst [vmem:[%s8 + $0x54] sm:$0xf] %v1581
  %1646 = vst [vmem:[%s8 + $0x58] sm:$0xf] %v1582
  %1647 = vst [vmem:[%s8 + $0x5c] sm:$0xf] %v1583
  %1648 = vst [vmem:[%s8 + $0x60] sm:$0xf] %v1584
  %1649 = vst [vmem:[%s8 + $0x64] sm:$0xf] %v1585
  %1650 = vst [vmem:[%s8 + $0x68] sm:$0xf] %v1586
  %1651 = vst [vmem:[%s8 + $0x6c] sm:$0xf] %v1587
  %1652 = vst [vmem:[%s8 + $0x70] sm:$0xf] %v1588
  %1653 = vst [vmem:[%s8 + $0x74] sm:$0xf] %v1589
  %1654 = vst [vmem:[%s8 + $0x78] sm:$0xf] %v1590
  %1655 = vst [vmem:[%s8 + $0x7c] sm:$0xf] %v1591
  // Predicated region
  $region34: #{gcn_network_forward.1} parent=0 // pred_check
    _
  $region35: #{gcn_network_forward.1} parent=0 // pred_check_branch
    %1657 = sbr.rel (0) target = $region37
  $region36: #{gcn_network_forward.1} parent=0 // pred_region
    _
  $region37: #{gcn_network_forward.1} parent=0 // pred_fallthru
    _
  // Predicated region
  $region38: #{gcn_network_forward.1} parent=0 // pred_check
    _
  $region39: #{gcn_network_forward.1} parent=0 // pred_check_branch
    %1659 = sbr.rel (0) target = $region41
  $region40: #{gcn_network_forward.1} parent=0 // pred_region
    _
  $region41: #{gcn_network_forward.1} parent=0 // pred_fallthru
    _

</llo_original>
